<compile_context>
chip_gen: v7x
topology: tpu7x:2x2x1
jax: 0.10.0
libtpu: 0.0.40
codegen_flags: <defaults>
</compile_context>

<pallas_src>
import jax
import jax.numpy as jnp
from jax import lax
from jax.experimental import pallas as pl
from jax.experimental.pallas import tpu as pltpu


# ----------------------------- shared math --------------------------------
def _layernorm_last(x, w, b, eps=1e-5):
    # LayerNorm over the last axis (PyTorch default eps=1e-5).
    mean = jnp.mean(x, axis=-1, keepdims=True)
    var = jnp.mean((x - mean) ** 2, axis=-1, keepdims=True)
    return (x - mean) * lax.rsqrt(var + eps) * w + b


def _gelu_exact(x):
    # nn.GELU() default = exact erf formulation.
    return 0.5 * x * (1.0 + lax.erf(x * 0.7071067811865476))


# ----------------------------- Pallas kernel -------------------------------
def _make_kernel(offsets, shapes, B, F, L, n_enc, n_dec):
    """offsets/shapes: static row offsets + (rows, cols) of each packed param."""

    def kernel(x_ref, p_ref, out_ref):
        def getp(i):
            r0 = offsets[i]
            rows, cols = shapes[i]
            # Static slice -> view, no runtime cost.
            return p_ref[pl.ds(r0, rows), pl.ds(0, cols)]

        x = x_ref[...]                                # (B, F, L), float32
        idx = 0

        # --------------------- Encoder: LEncoderLayer ---------------------
        for _ in range(n_enc):
            mk_t = getp(idx + 0)                      # (L, S)  = mk.weight.T
            mv_t = getp(idx + 1)                      # (S, L)  = mv.weight.T
            f2_t = getp(idx + 2)                      # (L, L)  = feed2.weight.T
            f2_b = getp(idx + 3)                      # (1, L)
            n1_w = getp(idx + 4)                      # (1, L)
            n1_b = getp(idx + 5)                      # (1, L)
            n2_w = getp(idx + 6)                      # (1, L)
            n2_b = getp(idx + 7)                      # (1, L)
            idx += 8

            # TemporalExternalAttn; queries already live in (B, F, L) layout.
            attn = jnp.einsum('bfl,ls->bfs', x, mk_t,
                              preferred_element_type=jnp.float32)   # (B, F, S)
            # nn.Softmax(dim=1): softmax over the F axis.
            m = jnp.max(attn, axis=1, keepdims=True)
            e = jnp.exp(attn - m)
            denom = jnp.sum(e, axis=1, keepdims=True)
            attn = e * pl.reciprocal(denom, approx=True)
            av = jnp.einsum('bfs,sl->bfl', attn, mv_t,
                            preferred_element_type=jnp.float32)     # (B, F, L)
            x = x + av                                               # residual
            # drop1 (Dropout 0.2) is identity at inference.
            x = _layernorm_last(x, n1_w, n1_b)                       # norm1

            ff = jnp.einsum('bfl,lm->bfm', x, f2_t,
                            preferred_element_type=jnp.float32) + f2_b
            x = x + ff                                               # residual
            x = _layernorm_last(x, n2_w, n2_b)                       # norm2

        # ------------------------- Decoder: MLPs --------------------------
        # PyTorch: x.permute(0,2,1).view(B,-1) on a (B,L,F) tensor == plain
        # reshape of our (B,F,L) tensor.
        flat = x.reshape(B, F * L)
        for _ in range(n_dec):
            w1 = getp(idx + 0)                        # (in, H)  = l1.weight.T
            b1 = getp(idx + 1)                        # (1, H)
            w2 = getp(idx + 2)                        # (H, out) = l2.weight.T
            b2 = getp(idx + 3)                        # (1, out)
            idx += 4
            h = jnp.dot(flat, w1, preferred_element_type=jnp.float32) + b1
            h = _gelu_exact(h)
            flat = jnp.dot(h, w2, preferred_element_type=jnp.float32) + b2

        out_ref[...] = flat                           # (B, pred_len*num_outputs)

    return kernel


# --------------------------- host-side packing ------------------------------
def _round_up(n, m):
    return ((n + m - 1) // m) * m


def _pack_params(arrays):
    """Pack 2-D f32 arrays into one (R, C) buffer; each block 8-row aligned."""
    arrays = [jnp.asarray(a, jnp.float32) for a in arrays]
    C = max(int(a.shape[1]) for a in arrays)
    offsets, shapes = [], []
    r = 0
    for a in arrays:
        offsets.append(r)
        shapes.append((int(a.shape[0]), int(a.shape[1])))
        r += _round_up(int(a.shape[0]), 8)
    R = _round_up(max(r, 8), 8)
    buf = jnp.zeros((R, C), jnp.float32)
    for a, off in zip(arrays, offsets):
        buf = buf.at[off:off + a.shape[0], 0:a.shape[1]].set(a)
    return buf, tuple(offsets), tuple(shapes)


def meaformer_forward(src, torch_params, *, pred_len, num_outputs, n_enc, n_dec):
    """src: (B, L, F). torch_params use PyTorch shapes (weight=(out,in), bias=(out,))."""
    B, L, F = src.shape

    # One-time host-side layout work: transpose weights to (in,out), make every
    # bias / LN param a (1,dim) row, and pack everything into a single buffer.
    packed_list = []
    idx = 0
    for _ in range(n_enc):
        mk_w, mv_w, f2_w, f2_b, n1_w, n1_b, n2_w, n2_b = torch_params[idx:idx + 8]
        idx += 8
        packed_list += [mk_w.T, mv_w.T, f2_w.T,
                        f2_b.reshape(1, -1), n1_w.reshape(1, -1),
                        n1_b.reshape(1, -1), n2_w.reshape(1, -1),
                        n2_b.reshape(1, -1)]
    for _ in range(n_dec):
        w1, b1, w2, b2 = torch_params[idx:idx + 4]
        idx += 4
        packed_list += [w1.T, b1.reshape(1, -1), w2.T, b2.reshape(1, -1)]

    pbuf, offsets, shapes = _pack_params(packed_list)
    x_bfl = jnp.transpose(src, (0, 2, 1)).astype(jnp.float32)   # (B, F, L)

    out_cols = pred_len * num_outputs
    out_shape = jax.ShapeDtypeStruct((B, out_cols), jnp.float32)

    # Rough cost hint for XLA's scheduler.
    S = int(packed_list[0].shape[1])
    H = int(packed_list[8 * n_enc].shape[1])
    flops = n_enc * (4 * B * F * L * S + 2 * B * F * L * L)
    d_in = F * L
    for _ in range(n_dec):
        flops += 2 * B * (d_in * H + H * out_cols)
        d_in = pred_len * F
    ce = pl.CostEstimate(
        flops=flops,
        transcendentals=n_enc * B * F * S + n_dec * B * H,
        bytes_accessed=4 * (int(x_bfl.size) + int(pbuf.size) + B * out_cols))

    kernel = _make_kernel(offsets, shapes, B, F, L, n_enc, n_dec)
    out2d = pl.pallas_call(
        kernel,
        grid=(1,),
        in_specs=[pl.BlockSpec((B, F, L), lambda i: (0, 0, 0)),
                  pl.BlockSpec(pbuf.shape, lambda i: (0, 0))],
        out_specs=pl.BlockSpec((B, out_cols), lambda i: (0, 0)),
        out_shape=out_shape,
        compiler_params=pltpu.CompilerParams(
            # TODO(synk): for large batches, grid over B with "parallel" would
            # shard across v7x's two TensorCores; pointless at B=2.
            dimension_semantics=("arbitrary",)),
        cost_estimate=ce,
    )(x_bfl, pbuf)

    return out2d.reshape(B, pred_len, num_outputs)


# ------------------------- pure-JAX reference -------------------------------
def _reference_forward(src, torch_params, *, pred_len, num_outputs, n_enc, n_dec):
    """Faithful transcription of the PyTorch forward (exact division softmax)."""
    B, L, F = src.shape
    x = src
    idx = 0
    for _ in range(n_enc):
        mk_w, mv_w, f2_w, f2_b, n1_w, n1_b, n2_w, n2_b = torch_params[idx:idx + 8]
        idx += 8
        q = jnp.transpose(x, (0, 2, 1))                      # (B, F, L)
        attn = jnp.einsum('bfl,sl->bfs', q, mk_w)
        attn = jax.nn.softmax(attn, axis=1)
        av = jnp.einsum('bfs,ls->bfl', attn, mv_w)
        x = x + jnp.transpose(av, (0, 2, 1))
        x = jnp.transpose(_layernorm_last(jnp.transpose(x, (0, 2, 1)), n1_w, n1_b),
                          (0, 2, 1))
        ff = jnp.transpose(x, (0, 2, 1)) @ f2_w.T + f2_b
        x = x + jnp.transpose(ff, (0, 2, 1))
        x = jnp.transpose(_layernorm_last(jnp.transpose(x, (0, 2, 1)), n2_w, n2_b),
                          (0, 2, 1))
    flat = jnp.transpose(x, (0, 2, 1)).reshape(B, F * L)
    for _ in range(n_dec):
        w1, b1, w2, b2 = torch_params[idx:idx + 4]
        idx += 4
        h = _gelu_exact(flat @ w1.T + b1)
        flat = h @ w2.T + b2
    return flat.reshape(B, pred_len, num_outputs)


# --------------------------------- main ------------------------------------
if __name__ == "__main__":
    B = 2
    seq_len = 8          # L
    pred_len = 4
    S = 16
    n_encoder_layers = 2
    n_decoder_layers = 2
    hidden_size = 32
    num_features = 4     # F (num_outputs == num_features so stacked decoder
    num_outputs = 4      #    MLP layers chain correctly, as the module assumes)

    keys = iter(jax.random.split(jax.random.PRNGKey(0), 64))
    nxt = lambda: next(keys)
    f32 = jnp.float32

    params = []
    # Encoder layer parameters (LEncoderLayer, norm='ln'), PyTorch shapes:
    for _ in range(n_encoder_layers):
        params.append(0.1 * jax.random.normal(nxt(), (S, seq_len), f32))          # mk.weight
        params.append(0.1 * jax.random.normal(nxt(), (seq_len, S), f32))          # mv.weight
        params.append(0.1 * jax.random.normal(nxt(), (seq_len, seq_len), f32))    # feed2.weight
        params.append(0.05 * jax.random.normal(nxt(), (seq_len,), f32))           # feed2.bias
        params.append(1.0 + 0.05 * jax.random.normal(nxt(), (seq_len,), f32))     # norm1.weight
        params.append(0.05 * jax.random.normal(nxt(), (seq_len,), f32))           # norm1.bias
        params.append(1.0 + 0.05 * jax.random.normal(nxt(), (seq_len,), f32))     # norm2.weight
        params.append(0.05 * jax.random.normal(nxt(), (seq_len,), f32))           # norm2.bias
    # Decoder MLP layers:
    in_dim = seq_len * num_features
    out_dim = pred_len * num_outputs
    for l in range(n_decoder_layers):
        params.append(0.1 * jax.random.normal(nxt(), (hidden_size, in_dim), f32))   # l1.weight
        params.append(0.05 * jax.random.normal(nxt(), (hidden_size,), f32))         # l1.bias
        params.append(0.1 * jax.random.normal(nxt(), (out_dim, hidden_size), f32))  # l2.weight
        params.append(0.05 * jax.random.normal(nxt(), (out_dim,), f32))             # l2.bias
        in_dim = pred_len * num_features

    # Inputs. trg / trg_teacher_forcing are unused by the PyTorch forward and
    # trg_y is passed through untouched.
    src = jax.random.normal(nxt(), (B, seq_len, num_features), f32)
    trg_y = jax.random.normal(nxt(), (B, pred_len, num_outputs), f32)

    pred = meaformer_forward(
        src, params,
        pred_len=pred_len, num_outputs=num_outputs,
        n_enc=n_encoder_layers, n_dec=n_decoder_layers)
    pred = jax.block_until_ready(pred)

    ref = _reference_forward(
        src, params,
        pred_len=pred_len, num_outputs=num_outputs,
        n_enc=n_encoder_layers, n_dec=n_decoder_layers)
    ref = jax.block_until_ready(ref)

    assert pred.shape == (B, pred_len, num_outputs)
    assert jnp.allclose(pred, ref, rtol=2e-3, atol=2e-3), \
        "Pallas kernel mismatch vs JAX reference"

    # MEAformer.forward returns (pred, trg_y); trg_y is an identity pass-through.
    outputs = (pred, trg_y)
    print("KERNEL_OK")
</pallas_src>

<mosaic_0001>
module attributes {stable_mosaic.version = 11 : i64} {
  func.func @kernel(%arg0: i32, %arg1: memref<2x4x8xf32, #tpu.memory_space<vmem>>, %arg2: memref<288x32xf32, #tpu.memory_space<vmem>>, %arg3: memref<2x16xf32, #tpu.memory_space<vmem>>) attributes {dimension_semantics = [#tpu.dimension_semantics<arbitrary>], iteration_bounds = array<i64: 1>, scalar_prefetch = 0 : i64, scratch_operands = 0 : i64, tpu.core_type = #tpu.core_type<tc>, window_params = [{pipeline_mode = #tpu.pipeline_mode<synchronous>, transform_indices = @transform_0, window_bounds = array<i64: 2, 4, 8>}, {pipeline_mode = #tpu.pipeline_mode<synchronous>, transform_indices = @transform_1, window_bounds = array<i64: 288, 32>}, {pipeline_mode = #tpu.pipeline_mode<synchronous>, transform_indices = @transform_2, window_bounds = array<i64: 2, 16>}]} {
    %c0 = arith.constant 0 : index
    %c0_0 = arith.constant 0 : index
    %c0_1 = arith.constant 0 : index
    %0 = vector.load %arg1[%c0, %c0_0, %c0_1] : memref<2x4x8xf32, #tpu.memory_space<vmem>>, vector<2x4x8xf32>
    %c0_2 = arith.constant 0 : index
    %c0_3 = arith.constant 0 : index
    %1 = vector.load %arg2[%c0_2, %c0_3] : memref<288x32xf32, #tpu.memory_space<vmem>>, vector<8x16xf32>
    %c8 = arith.constant 8 : index
    %c0_4 = arith.constant 0 : index
    %2 = vector.load %arg2[%c8, %c0_4] : memref<288x32xf32, #tpu.memory_space<vmem>>, vector<16x8xf32>
    %c24 = arith.constant 24 : index
    %c0_5 = arith.constant 0 : index
    %3 = vector.load %arg2[%c24, %c0_5] : memref<288x32xf32, #tpu.memory_space<vmem>>, vector<8x8xf32>
    %c32 = arith.constant 32 : index
    %c0_6 = arith.constant 0 : index
    %4 = vector.load %arg2[%c32, %c0_6] : memref<288x32xf32, #tpu.memory_space<vmem>>, vector<1x8xf32>
    %c40 = arith.constant 40 : index
    %c0_7 = arith.constant 0 : index
    %5 = vector.load %arg2[%c40, %c0_7] : memref<288x32xf32, #tpu.memory_space<vmem>>, vector<1x8xf32>
    %c48 = arith.constant 48 : index
    %c0_8 = arith.constant 0 : index
    %6 = vector.load %arg2[%c48, %c0_8] : memref<288x32xf32, #tpu.memory_space<vmem>>, vector<1x8xf32>
    %c56 = arith.constant 56 : index
    %c0_9 = arith.constant 0 : index
    %7 = vector.load %arg2[%c56, %c0_9] : memref<288x32xf32, #tpu.memory_space<vmem>>, vector<1x8xf32>
    %c64 = arith.constant 64 : index
    %c0_10 = arith.constant 0 : index
    %8 = vector.load %arg2[%c64, %c0_10] : memref<288x32xf32, #tpu.memory_space<vmem>>, vector<1x8xf32>
    "tpu.trace_start"() <{level = 10 : i32, message = "bfl,ls->bfs"}> : () -> ()
    %cst = arith.constant dense<0.000000e+00> : vector<2x4x16xf32>
    %9 = tpu.matmul %0, %1, %cst {dimension_numbers = #tpu.dot_dimension_numbers<[2], [0], [0, 1], [1], [0, 0, 0, 1, 1, 1], [], []>} : vector<2x4x8xf32>, vector<8x16xf32>, vector<2x4x16xf32> -> vector<2x4x16xf32>
    "tpu.trace_stop"() : () -> ()
    %cst_11 = arith.constant dense<0xFF800000> : vector<2x16xf32>
    %10 = vector.multi_reduction <maximumf>, %9, %cst_11 [1] : vector<2x4x16xf32> to vector<2x16xf32>
    %11 = vector.shape_cast %10 : vector<2x16xf32> to vector<2x1x16xf32>
    %12 = vector.broadcast %11 : vector<2x1x16xf32> to vector<2x4x16xf32>
    %13 = arith.subf %9, %12 : vector<2x4x16xf32>
    %14 = math.exp %13 : vector<2x4x16xf32>
    %cst_12 = arith.constant dense<0.000000e+00> : vector<2x16xf32>
    %15 = vector.multi_reduction <add>, %14, %cst_12 [1] : vector<2x4x16xf32> to vector<2x16xf32>
    %16 = vector.shape_cast %15 : vector<2x16xf32> to vector<2x1x16xf32>
    %17 = tpu.reciprocal %16 {approx = true} : vector<2x1x16xf32> -> vector<2x1x16xf32>
    %18 = vector.broadcast %17 : vector<2x1x16xf32> to vector<2x4x16xf32>
    %19 = arith.mulf %14, %18 : vector<2x4x16xf32>
    "tpu.trace_start"() <{level = 10 : i32, message = "bfs,sl->bfl"}> : () -> ()
    %cst_13 = arith.constant dense<0.000000e+00> : vector<2x4x8xf32>
    %20 = tpu.matmul %19, %2, %cst_13 {dimension_numbers = #tpu.dot_dimension_numbers<[2], [0], [0, 1], [1], [0, 0, 0, 1, 1, 1], [], []>} : vector<2x4x16xf32>, vector<16x8xf32>, vector<2x4x8xf32> -> vector<2x4x8xf32>
    "tpu.trace_stop"() : () -> ()
    %21 = arith.addf %0, %20 : vector<2x4x8xf32>
    %cst_14 = arith.constant dense<0.000000e+00> : vector<2x4xf32>
    %22 = vector.multi_reduction <add>, %21, %cst_14 [2] : vector<2x4x8xf32> to vector<2x4xf32>
    %23 = vector.shape_cast %22 : vector<2x4xf32> to vector<2x4x1xf32>
    %cst_15 = arith.constant 8.000000e+00 : f32
    %24 = vector.broadcast %cst_15 : f32 to vector<2x4x1xf32>
    %25 = arith.divf %23, %24 : vector<2x4x1xf32>
    %26 = vector.broadcast %25 : vector<2x4x1xf32> to vector<2x4x8xf32>
    %27 = arith.subf %21, %26 : vector<2x4x8xf32>
    %28 = arith.mulf %27, %27 : vector<2x4x8xf32>
    %cst_16 = arith.constant dense<0.000000e+00> : vector<2x4xf32>
    %29 = vector.multi_reduction <add>, %28, %cst_16 [2] : vector<2x4x8xf32> to vector<2x4xf32>
    %30 = vector.shape_cast %29 : vector<2x4xf32> to vector<2x4x1xf32>
    %cst_17 = arith.constant 8.000000e+00 : f32
    %31 = vector.broadcast %cst_17 : f32 to vector<2x4x1xf32>
    %32 = arith.divf %30, %31 : vector<2x4x1xf32>
    %33 = vector.broadcast %25 : vector<2x4x1xf32> to vector<2x4x8xf32>
    %34 = arith.subf %21, %33 : vector<2x4x8xf32>
    %cst_18 = arith.constant 9.99999974E-6 : f32
    %35 = vector.broadcast %cst_18 : f32 to vector<2x4x1xf32>
    %36 = arith.addf %32, %35 : vector<2x4x1xf32>
    %37 = math.rsqrt %36 : vector<2x4x1xf32>
    %38 = vector.broadcast %37 : vector<2x4x1xf32> to vector<2x4x8xf32>
    %39 = arith.mulf %34, %38 : vector<2x4x8xf32>
    %40 = vector.shape_cast %5 : vector<1x8xf32> to vector<1x1x8xf32>
    %41 = vector.broadcast %40 : vector<1x1x8xf32> to vector<2x4x8xf32>
    %42 = arith.mulf %39, %41 : vector<2x4x8xf32>
    %43 = vector.shape_cast %6 : vector<1x8xf32> to vector<1x1x8xf32>
    %44 = vector.broadcast %43 : vector<1x1x8xf32> to vector<2x4x8xf32>
    %45 = arith.addf %42, %44 : vector<2x4x8xf32>
    "tpu.trace_start"() <{level = 10 : i32, message = "bfl,lm->bfm"}> : () -> ()
    %cst_19 = arith.constant dense<0.000000e+00> : vector<2x4x8xf32>
    %46 = tpu.matmul %45, %3, %cst_19 {dimension_numbers = #tpu.dot_dimension_numbers<[2], [0], [0, 1], [1], [0, 0, 0, 1, 1, 1], [], []>} : vector<2x4x8xf32>, vector<8x8xf32>, vector<2x4x8xf32> -> vector<2x4x8xf32>
    "tpu.trace_stop"() : () -> ()
    %47 = vector.shape_cast %4 : vector<1x8xf32> to vector<1x1x8xf32>
    %48 = vector.broadcast %47 : vector<1x1x8xf32> to vector<2x4x8xf32>
    %49 = arith.addf %46, %48 : vector<2x4x8xf32>
    %50 = arith.addf %45, %49 : vector<2x4x8xf32>
    %cst_20 = arith.constant dense<0.000000e+00> : vector<2x4xf32>
    %51 = vector.multi_reduction <add>, %50, %cst_20 [2] : vector<2x4x8xf32> to vector<2x4xf32>
    %52 = vector.shape_cast %51 : vector<2x4xf32> to vector<2x4x1xf32>
    %cst_21 = arith.constant 8.000000e+00 : f32
    %53 = vector.broadcast %cst_21 : f32 to vector<2x4x1xf32>
    %54 = arith.divf %52, %53 : vector<2x4x1xf32>
    %55 = vector.broadcast %54 : vector<2x4x1xf32> to vector<2x4x8xf32>
    %56 = arith.subf %50, %55 : vector<2x4x8xf32>
    %57 = arith.mulf %56, %56 : vector<2x4x8xf32>
    %cst_22 = arith.constant dense<0.000000e+00> : vector<2x4xf32>
    %58 = vector.multi_reduction <add>, %57, %cst_22 [2] : vector<2x4x8xf32> to vector<2x4xf32>
    %59 = vector.shape_cast %58 : vector<2x4xf32> to vector<2x4x1xf32>
    %cst_23 = arith.constant 8.000000e+00 : f32
    %60 = vector.broadcast %cst_23 : f32 to vector<2x4x1xf32>
    %61 = arith.divf %59, %60 : vector<2x4x1xf32>
    %62 = vector.broadcast %54 : vector<2x4x1xf32> to vector<2x4x8xf32>
    %63 = arith.subf %50, %62 : vector<2x4x8xf32>
    %cst_24 = arith.constant 9.99999974E-6 : f32
    %64 = vector.broadcast %cst_24 : f32 to vector<2x4x1xf32>
    %65 = arith.addf %61, %64 : vector<2x4x1xf32>
    %66 = math.rsqrt %65 : vector<2x4x1xf32>
    %67 = vector.broadcast %66 : vector<2x4x1xf32> to vector<2x4x8xf32>
    %68 = arith.mulf %63, %67 : vector<2x4x8xf32>
    %69 = vector.shape_cast %7 : vector<1x8xf32> to vector<1x1x8xf32>
    %70 = vector.broadcast %69 : vector<1x1x8xf32> to vector<2x4x8xf32>
    %71 = arith.mulf %68, %70 : vector<2x4x8xf32>
    %72 = vector.shape_cast %8 : vector<1x8xf32> to vector<1x1x8xf32>
    %73 = vector.broadcast %72 : vector<1x1x8xf32> to vector<2x4x8xf32>
    %74 = arith.addf %71, %73 : vector<2x4x8xf32>
    %c72 = arith.constant 72 : index
    %c0_25 = arith.constant 0 : index
    %75 = vector.load %arg2[%c72, %c0_25] : memref<288x32xf32, #tpu.memory_space<vmem>>, vector<8x16xf32>
    %c80 = arith.constant 80 : index
    %c0_26 = arith.constant 0 : index
    %76 = vector.load %arg2[%c80, %c0_26] : memref<288x32xf32, #tpu.memory_space<vmem>>, vector<16x8xf32>
    %c96 = arith.constant 96 : index
    %c0_27 = arith.constant 0 : index
    %77 = vector.load %arg2[%c96, %c0_27] : memref<288x32xf32, #tpu.memory_space<vmem>>, vector<8x8xf32>
    %c104 = arith.constant 104 : index
    %c0_28 = arith.constant 0 : index
    %78 = vector.load %arg2[%c104, %c0_28] : memref<288x32xf32, #tpu.memory_space<vmem>>, vector<1x8xf32>
    %c112 = arith.constant 112 : index
    %c0_29 = arith.constant 0 : index
    %79 = vector.load %arg2[%c112, %c0_29] : memref<288x32xf32, #tpu.memory_space<vmem>>, vector<1x8xf32>
    %c120 = arith.constant 120 : index
    %c0_30 = arith.constant 0 : index
    %80 = vector.load %arg2[%c120, %c0_30] : memref<288x32xf32, #tpu.memory_space<vmem>>, vector<1x8xf32>
    %c128 = arith.constant 128 : index
    %c0_31 = arith.constant 0 : index
    %81 = vector.load %arg2[%c128, %c0_31] : memref<288x32xf32, #tpu.memory_space<vmem>>, vector<1x8xf32>
    %c136 = arith.constant 136 : index
    %c0_32 = arith.constant 0 : index
    %82 = vector.load %arg2[%c136, %c0_32] : memref<288x32xf32, #tpu.memory_space<vmem>>, vector<1x8xf32>
    "tpu.trace_start"() <{level = 10 : i32, message = "bfl,ls->bfs"}> : () -> ()
    %cst_33 = arith.constant dense<0.000000e+00> : vector<2x4x16xf32>
    %83 = tpu.matmul %74, %75, %cst_33 {dimension_numbers = #tpu.dot_dimension_numbers<[2], [0], [0, 1], [1], [0, 0, 0, 1, 1, 1], [], []>} : vector<2x4x8xf32>, vector<8x16xf32>, vector<2x4x16xf32> -> vector<2x4x16xf32>
    "tpu.trace_stop"() : () -> ()
    %cst_34 = arith.constant dense<0xFF800000> : vector<2x16xf32>
    %84 = vector.multi_reduction <maximumf>, %83, %cst_34 [1] : vector<2x4x16xf32> to vector<2x16xf32>
    %85 = vector.shape_cast %84 : vector<2x16xf32> to vector<2x1x16xf32>
    %86 = vector.broadcast %85 : vector<2x1x16xf32> to vector<2x4x16xf32>
    %87 = arith.subf %83, %86 : vector<2x4x16xf32>
    %88 = math.exp %87 : vector<2x4x16xf32>
    %cst_35 = arith.constant dense<0.000000e+00> : vector<2x16xf32>
    %89 = vector.multi_reduction <add>, %88, %cst_35 [1] : vector<2x4x16xf32> to vector<2x16xf32>
    %90 = vector.shape_cast %89 : vector<2x16xf32> to vector<2x1x16xf32>
    %91 = tpu.reciprocal %90 {approx = true} : vector<2x1x16xf32> -> vector<2x1x16xf32>
    %92 = vector.broadcast %91 : vector<2x1x16xf32> to vector<2x4x16xf32>
    %93 = arith.mulf %88, %92 : vector<2x4x16xf32>
    "tpu.trace_start"() <{level = 10 : i32, message = "bfs,sl->bfl"}> : () -> ()
    %cst_36 = arith.constant dense<0.000000e+00> : vector<2x4x8xf32>
    %94 = tpu.matmul %93, %76, %cst_36 {dimension_numbers = #tpu.dot_dimension_numbers<[2], [0], [0, 1], [1], [0, 0, 0, 1, 1, 1], [], []>} : vector<2x4x16xf32>, vector<16x8xf32>, vector<2x4x8xf32> -> vector<2x4x8xf32>
    "tpu.trace_stop"() : () -> ()
    %95 = arith.addf %74, %94 : vector<2x4x8xf32>
    %cst_37 = arith.constant dense<0.000000e+00> : vector<2x4xf32>
    %96 = vector.multi_reduction <add>, %95, %cst_37 [2] : vector<2x4x8xf32> to vector<2x4xf32>
    %97 = vector.shape_cast %96 : vector<2x4xf32> to vector<2x4x1xf32>
    %cst_38 = arith.constant 8.000000e+00 : f32
    %98 = vector.broadcast %cst_38 : f32 to vector<2x4x1xf32>
    %99 = arith.divf %97, %98 : vector<2x4x1xf32>
    %100 = vector.broadcast %99 : vector<2x4x1xf32> to vector<2x4x8xf32>
    %101 = arith.subf %95, %100 : vector<2x4x8xf32>
    %102 = arith.mulf %101, %101 : vector<2x4x8xf32>
    %cst_39 = arith.constant dense<0.000000e+00> : vector<2x4xf32>
    %103 = vector.multi_reduction <add>, %102, %cst_39 [2] : vector<2x4x8xf32> to vector<2x4xf32>
    %104 = vector.shape_cast %103 : vector<2x4xf32> to vector<2x4x1xf32>
    %cst_40 = arith.constant 8.000000e+00 : f32
    %105 = vector.broadcast %cst_40 : f32 to vector<2x4x1xf32>
    %106 = arith.divf %104, %105 : vector<2x4x1xf32>
    %107 = vector.broadcast %99 : vector<2x4x1xf32> to vector<2x4x8xf32>
    %108 = arith.subf %95, %107 : vector<2x4x8xf32>
    %cst_41 = arith.constant 9.99999974E-6 : f32
    %109 = vector.broadcast %cst_41 : f32 to vector<2x4x1xf32>
    %110 = arith.addf %106, %109 : vector<2x4x1xf32>
    %111 = math.rsqrt %110 : vector<2x4x1xf32>
    %112 = vector.broadcast %111 : vector<2x4x1xf32> to vector<2x4x8xf32>
    %113 = arith.mulf %108, %112 : vector<2x4x8xf32>
    %114 = vector.shape_cast %79 : vector<1x8xf32> to vector<1x1x8xf32>
    %115 = vector.broadcast %114 : vector<1x1x8xf32> to vector<2x4x8xf32>
    %116 = arith.mulf %113, %115 : vector<2x4x8xf32>
    %117 = vector.shape_cast %80 : vector<1x8xf32> to vector<1x1x8xf32>
    %118 = vector.broadcast %117 : vector<1x1x8xf32> to vector<2x4x8xf32>
    %119 = arith.addf %116, %118 : vector<2x4x8xf32>
    "tpu.trace_start"() <{level = 10 : i32, message = "bfl,lm->bfm"}> : () -> ()
    %cst_42 = arith.constant dense<0.000000e+00> : vector<2x4x8xf32>
    %120 = tpu.matmul %119, %77, %cst_42 {dimension_numbers = #tpu.dot_dimension_numbers<[2], [0], [0, 1], [1], [0, 0, 0, 1, 1, 1], [], []>} : vector<2x4x8xf32>, vector<8x8xf32>, vector<2x4x8xf32> -> vector<2x4x8xf32>
    "tpu.trace_stop"() : () -> ()
    %121 = vector.shape_cast %78 : vector<1x8xf32> to vector<1x1x8xf32>
    %122 = vector.broadcast %121 : vector<1x1x8xf32> to vector<2x4x8xf32>
    %123 = arith.addf %120, %122 : vector<2x4x8xf32>
    %124 = arith.addf %119, %123 : vector<2x4x8xf32>
    %cst_43 = arith.constant dense<0.000000e+00> : vector<2x4xf32>
    %125 = vector.multi_reduction <add>, %124, %cst_43 [2] : vector<2x4x8xf32> to vector<2x4xf32>
    %126 = vector.shape_cast %125 : vector<2x4xf32> to vector<2x4x1xf32>
    %cst_44 = arith.constant 8.000000e+00 : f32
    %127 = vector.broadcast %cst_44 : f32 to vector<2x4x1xf32>
    %128 = arith.divf %126, %127 : vector<2x4x1xf32>
    %129 = vector.broadcast %128 : vector<2x4x1xf32> to vector<2x4x8xf32>
    %130 = arith.subf %124, %129 : vector<2x4x8xf32>
    %131 = arith.mulf %130, %130 : vector<2x4x8xf32>
    %cst_45 = arith.constant dense<0.000000e+00> : vector<2x4xf32>
    %132 = vector.multi_reduction <add>, %131, %cst_45 [2] : vector<2x4x8xf32> to vector<2x4xf32>
    %133 = vector.shape_cast %132 : vector<2x4xf32> to vector<2x4x1xf32>
    %cst_46 = arith.constant 8.000000e+00 : f32
    %134 = vector.broadcast %cst_46 : f32 to vector<2x4x1xf32>
    %135 = arith.divf %133, %134 : vector<2x4x1xf32>
    %136 = vector.broadcast %128 : vector<2x4x1xf32> to vector<2x4x8xf32>
    %137 = arith.subf %124, %136 : vector<2x4x8xf32>
    %cst_47 = arith.constant 9.99999974E-6 : f32
    %138 = vector.broadcast %cst_47 : f32 to vector<2x4x1xf32>
    %139 = arith.addf %135, %138 : vector<2x4x1xf32>
    %140 = math.rsqrt %139 : vector<2x4x1xf32>
    %141 = vector.broadcast %140 : vector<2x4x1xf32> to vector<2x4x8xf32>
    %142 = arith.mulf %137, %141 : vector<2x4x8xf32>
    %143 = vector.shape_cast %81 : vector<1x8xf32> to vector<1x1x8xf32>
    %144 = vector.broadcast %143 : vector<1x1x8xf32> to vector<2x4x8xf32>
    %145 = arith.mulf %142, %144 : vector<2x4x8xf32>
    %146 = vector.shape_cast %82 : vector<1x8xf32> to vector<1x1x8xf32>
    %147 = vector.broadcast %146 : vector<1x1x8xf32> to vector<2x4x8xf32>
    %148 = arith.addf %145, %147 : vector<2x4x8xf32>
    %149 = vector.shape_cast %148 : vector<2x4x8xf32> to vector<2x32xf32>
    %c144 = arith.constant 144 : index
    %c0_48 = arith.constant 0 : index
    %150 = vector.load %arg2[%c144, %c0_48] : memref<288x32xf32, #tpu.memory_space<vmem>>, vector<32x32xf32>
    %c176 = arith.constant 176 : index
    %c0_49 = arith.constant 0 : index
    %151 = vector.load %arg2[%c176, %c0_49] : memref<288x32xf32, #tpu.memory_space<vmem>>, vector<1x32xf32>
    %c184 = arith.constant 184 : index
    %c0_50 = arith.constant 0 : index
    %152 = vector.load %arg2[%c184, %c0_50] : memref<288x32xf32, #tpu.memory_space<vmem>>, vector<32x16xf32>
    %c216 = arith.constant 216 : index
    %c0_51 = arith.constant 0 : index
    %153 = vector.load %arg2[%c216, %c0_51] : memref<288x32xf32, #tpu.memory_space<vmem>>, vector<1x16xf32>
    %cst_52 = arith.constant dense<0.000000e+00> : vector<2x32xf32>
    %154 = tpu.matmul %149, %150, %cst_52 {dimension_numbers = #tpu.dot_dimension_numbers<[1], [0], [0], [1], [0, 0, 1, 1], [], []>} : vector<2x32xf32>, vector<32x32xf32>, vector<2x32xf32> -> vector<2x32xf32>
    %155 = vector.broadcast %151 : vector<1x32xf32> to vector<2x32xf32>
    %156 = arith.addf %154, %155 : vector<2x32xf32>
    %cst_53 = arith.constant 5.000000e-01 : f32
    %157 = vector.broadcast %cst_53 : f32 to vector<2x32xf32>
    %158 = arith.mulf %157, %156 : vector<2x32xf32>
    %cst_54 = arith.constant 0.707106769 : f32
    %159 = vector.broadcast %cst_54 : f32 to vector<2x32xf32>
    %160 = arith.mulf %156, %159 : vector<2x32xf32>
    %161 = math.erf %160 : vector<2x32xf32>
    %cst_55 = arith.constant 1.000000e+00 : f32
    %162 = vector.broadcast %cst_55 : f32 to vector<2x32xf32>
    %163 = arith.addf %162, %161 : vector<2x32xf32>
    %164 = arith.mulf %158, %163 : vector<2x32xf32>
    %cst_56 = arith.constant dense<0.000000e+00> : vector<2x16xf32>
    %165 = tpu.matmul %164, %152, %cst_56 {dimension_numbers = #tpu.dot_dimension_numbers<[1], [0], [0], [1], [0, 0, 1, 1], [], []>} : vector<2x32xf32>, vector<32x16xf32>, vector<2x16xf32> -> vector<2x16xf32>
    %166 = vector.broadcast %153 : vector<1x16xf32> to vector<2x16xf32>
    %167 = arith.addf %165, %166 : vector<2x16xf32>
    %c224 = arith.constant 224 : index
    %c0_57 = arith.constant 0 : index
    %168 = vector.load %arg2[%c224, %c0_57] : memref<288x32xf32, #tpu.memory_space<vmem>>, vector<16x32xf32>
    %c240 = arith.constant 240 : index
    %c0_58 = arith.constant 0 : index
    %169 = vector.load %arg2[%c240, %c0_58] : memref<288x32xf32, #tpu.memory_space<vmem>>, vector<1x32xf32>
    %c248 = arith.constant 248 : index
    %c0_59 = arith.constant 0 : index
    %170 = vector.load %arg2[%c248, %c0_59] : memref<288x32xf32, #tpu.memory_space<vmem>>, vector<32x16xf32>
    %c280 = arith.constant 280 : index
    %c0_60 = arith.constant 0 : index
    %171 = vector.load %arg2[%c280, %c0_60] : memref<288x32xf32, #tpu.memory_space<vmem>>, vector<1x16xf32>
    %cst_61 = arith.constant dense<0.000000e+00> : vector<2x32xf32>
    %172 = tpu.matmul %167, %168, %cst_61 {dimension_numbers = #tpu.dot_dimension_numbers<[1], [0], [0], [1], [0, 0, 1, 1], [], []>} : vector<2x16xf32>, vector<16x32xf32>, vector<2x32xf32> -> vector<2x32xf32>
    %173 = vector.broadcast %169 : vector<1x32xf32> to vector<2x32xf32>
    %174 = arith.addf %172, %173 : vector<2x32xf32>
    %cst_62 = arith.constant 5.000000e-01 : f32
    %175 = vector.broadcast %cst_62 : f32 to vector<2x32xf32>
    %176 = arith.mulf %175, %174 : vector<2x32xf32>
    %cst_63 = arith.constant 0.707106769 : f32
    %177 = vector.broadcast %cst_63 : f32 to vector<2x32xf32>
    %178 = arith.mulf %174, %177 : vector<2x32xf32>
    %179 = math.erf %178 : vector<2x32xf32>
    %cst_64 = arith.constant 1.000000e+00 : f32
    %180 = vector.broadcast %cst_64 : f32 to vector<2x32xf32>
    %181 = arith.addf %180, %179 : vector<2x32xf32>
    %182 = arith.mulf %176, %181 : vector<2x32xf32>
    %cst_65 = arith.constant dense<0.000000e+00> : vector<2x16xf32>
    %183 = tpu.matmul %182, %170, %cst_65 {dimension_numbers = #tpu.dot_dimension_numbers<[1], [0], [0], [1], [0, 0, 1, 1], [], []>} : vector<2x32xf32>, vector<32x16xf32>, vector<2x16xf32> -> vector<2x16xf32>
    %184 = vector.broadcast %171 : vector<1x16xf32> to vector<2x16xf32>
    %185 = arith.addf %183, %184 : vector<2x16xf32>
    %c0_66 = arith.constant 0 : index
    %c0_67 = arith.constant 0 : index
    %186 = vector.load %arg3[%c0_66, %c0_67] : memref<2x16xf32, #tpu.memory_space<vmem>>, vector<2x16xf32>
    tpu.vector_store %arg3[%c0_66, %c0_67], %185 {strides = array<i32>} : memref<2x16xf32, #tpu.memory_space<vmem>>, vector<2x16xf32>,
    return
  }
  func.func @transform_0(%arg0: i32) -> (i32, i32, i32) {
    %c0_i32 = arith.constant 0 : i32
    %c0_i32_0 = arith.constant 0 : i32
    %c0_i32_1 = arith.constant 0 : i32
    %c0_i32_2 = arith.constant 0 : i32
    return %c0_i32, %c0_i32_0, %c0_i32_1 : i32, i32, i32
  }
  func.func @transform_1(%arg0: i32) -> (i32, i32) {
    %c0_i32 = arith.constant 0 : i32
    %c0_i32_0 = arith.constant 0 : i32
    %c0_i32_1 = arith.constant 0 : i32
    return %c0_i32, %c0_i32_0 : i32, i32
  }
  func.func @transform_2(%arg0: i32) -> (i32, i32) {
    %c0_i32 = arith.constant 0 : i32
    %c0_i32_0 = arith.constant 0 : i32
    %c0_i32_1 = arith.constant 0 : i32
    return %c0_i32, %c0_i32_0 : i32, i32
  }
}

</mosaic_0001>

<llo_original>
// kernel: tpu_custom_call.1
$region0: #{tpu_custom_call.1}
  #allocation0 [shape = 'u32[]', space=smem, size = 0x4, offset = 0x4, fixed_abs, tag = 'smem constant byte address 0x4 - core index']
  #allocation1 [shape = 'u32[144,128]{1,0:T(1,128)}', space=vmem, size = 0x12000, scoped, tag = 'internal scratch']
  %s0 = inlined_call_operand.vmem [shape: f32[2,4,8], index: 0, kind: input, shape index: {}]
  %s1 = inlined_call_operand.vmem [shape: f32[288,32], index: 1, kind: input, shape index: {}]
  %s2 = inlined_call_operand.hbm [shape: f32[2,16], index: 2, kind: output, shape index: {}]
  %s3 = sld [smem:[#allocation0]]
  $region18: #{tpu_custom_call.1} parent=0
    _
  %s5 = ssub.s32 1, %s3
  %s6 = scalar_select 0, %s5, %s3
  $region1: #{tpu_custom_call.1} parent=0
    #allocation2 [shape = 'u8[1024]{0}', space=vmem, size = 0x400, scoped, tag = 'output window, operand 0, single buffered']
    #allocation3 [shape = 's32[1]{0}', space=sflag, size = 0x4, scoped, tag = 'scoped memory for tpu_custom_call.1']
    %7 = vsyncpa [#allocation3], 0
    // Predicated region
    $region2: #{tpu_custom_call.1} parent=1 // pred_check
      _
    $region3: #{tpu_custom_call.1} parent=1 // pred_check_branch
      %9 = sbr.rel (0) target = $region5
    $region4: #{tpu_custom_call.1} parent=1 // pred_region
      _
    $region5: #{tpu_custom_call.1} parent=1 // pred_fallthru
      _
    // Predicated region
    $region6: #{tpu_custom_call.1} parent=1 // pred_check
      _
    $region7: #{tpu_custom_call.1} parent=1 // pred_check_branch
      %11 = sbr.rel (0) target = $region9
    $region8: #{tpu_custom_call.1} parent=1 // pred_region
      _
    $region9: #{tpu_custom_call.1} parent=1 // pred_fallthru
      _
    %v12 = vld [vmem:[%s0] sm:$0xf]
    %v13 = vld [vmem:[%s0 + $0x4] sm:$0xf]
    %v14 = vld [vmem:[%s1] sm:$0xff]
    %v15 = vld [vmem:[%s1 + $0x8] sm:$0xff]
    %v16 = vld [vmem:[%s1 + $0x10] sm:$0xff]
    %v17 = vld [vmem:[%s1 + $0x18] sm:$0xff]
    %v18 = vld [vmem:[%s1 + $0x20] sm:$0x1]
    %v19 = vld [vmem:[%s1 + $0x28] sm:$0x1]
    %v20 = vld [vmem:[%s1 + $0x30] sm:$0x1]
    %v21 = vld [vmem:[%s1 + $0x38] sm:$0x1]
    %v22 = vld [vmem:[%s1 + $0x40] sm:$0x1]
    %v25 = vcombine.low %v12, %v13
    %vm26 = vcmask 64512
    %v27 = vsel %vm26, %v25, 0
    %29 = vmatprep.subr.mxu0 0.0
    %30 = vmatpush1.msra.mxu0 %v14
    %31 = vmatprep.subr.mxu0 0.0
    %32 = vmatpush1.msra.mxu0 0.0
    %33 = vmatprep.subr.mxu0 0.0
    %34 = vmatpush1.msra.mxu0 0.0
    %35 = vmatprep.subr.mxu0 0.0
    %36 = vmatpush1.msra.mxu0 0.0
    %37 = vmatprep.subr.mxu0 0.0
    %38 = vmatpush1.msra.mxu0 0.0
    %39 = vmatprep.subr.mxu0 0.0
    %40 = vmatpush1.msra.mxu0 0.0
    %41 = vmatprep.subr.mxu0 0.0
    %42 = vmatpush1.msra.mxu0 0.0
    %43 = vmatprep.subr.mxu0 0.0
    %44 = vmatpush1.msra.mxu0 0.0
    %45 = vmatprep.subr.mxu0 0.0
    %46 = vmatpush1.msra.mxu0 0.0
    %47 = vmatprep.subr.mxu0 0.0
    %48 = vmatpush1.msra.mxu0 0.0
    %49 = vmatprep.subr.mxu0 0.0
    %50 = vmatpush1.msra.mxu0 0.0
    %51 = vmatprep.subr.mxu0 0.0
    %52 = vmatpush1.msra.mxu0 0.0
    %53 = vmatprep.subr.mxu0 0.0
    %54 = vmatpush1.msra.mxu0 0.0
    %55 = vmatprep.subr.mxu0 0.0
    %56 = vmatpush1.msra.mxu0 0.0
    %57 = vmatprep.subr.mxu0 0.0
    %58 = vmatpush1.msra.mxu0 0.0
    %59 = vmatprep.subr.mxu0 0.0
    %60 = vmatpush1.msra.mxu0 0.0
    %61 = vmatprep.subr.mxu0 0.0
    %62 = vmatpush1.msra.mxu0 0.0
    %63 = vmatprep.subr.mxu0 0.0
    %64 = vmatpush1.msra.mxu0 0.0
    %65 = vmatprep.subr.mxu0 0.0
    %66 = vmatpush1.msra.mxu0 0.0
    %67 = vmatprep.subr.mxu0 0.0
    %68 = vmatpush1.msra.mxu0 0.0
    %69 = vmatprep.subr.mxu0 0.0
    %70 = vmatpush1.msra.mxu0 0.0
    %71 = vmatprep.subr.mxu0 0.0
    %72 = vmatpush1.msra.mxu0 0.0
    %73 = vmatprep.subr.mxu0 0.0
    %74 = vmatpush1.msra.mxu0 0.0
    %75 = vmatprep.subr.mxu0 0.0
    %76 = vmatpush1.msra.mxu0 0.0
    %77 = vmatprep.subr.mxu0 0.0
    %78 = vmatpush1.msra.mxu0 0.0
    %79 = vmatprep.subr.mxu0 0.0
    %80 = vmatpush1.msra.mxu0 0.0
    %81 = vmatprep.subr.mxu0 0.0
    %82 = vmatpush1.msra.mxu0 0.0
    %83 = vmatprep.subr.mxu0 0.0
    %84 = vmatpush1.msra.mxu0 0.0
    %85 = vmatprep.subr.mxu0 0.0
    %86 = vmatpush1.msra.mxu0 0.0
    %87 = vmatprep.subr.mxu0 0.0
    %88 = vmatpush1.msra.mxu0 0.0
    %89 = vmatprep.subr.mxu0 0.0
    %90 = vmatpush1.msra.mxu0 0.0
    %91 = vmatprep.subr.mxu0 0.0
    %92 = vmatpush1.msra.mxu0 0.0
    %93 = vmatprep.mubr.f32.mxu0 0.0
    %94 = vmatmul.mubr.f32.gmra.mrb[0].mxu0 %v27
    %v95 = vpop.f32.mrb[0].mxu0
    %v96 = vadd.f32 0.0, %v95
    %v97 = vpop.f32.mrb[0].mxu0
    %98 = vdwg.mxu0
    %v100 = vcombine.high %v96, %v96
    %vm102 = vcmask 125952
    %v103 = vsel %vm102, %v96, -inf
    %v104 = vrot.slane %v103, 4
    %v105 = vmax.f32 %v103, %v104
    %v106 = vrot.slane %v105, 2
    %v107 = vmax.f32 %v105, %v106
    %v108 = vrot.slane %v107, 1
    %v109 = vmax.f32 %v107, %v108
    %v110 = vsel %vm102, %v100, -inf
    %v111 = vrot.slane %v110, 4
    %v112 = vmax.f32 %v110, %v111
    %v113 = vrot.slane %v112, 2
    %v114 = vmax.f32 %v112, %v113
    %v115 = vrot.slane %v114, 1
    %v116 = vmax.f32 %v114, %v115
    %v117 = vsub.f32 %v96, %v109
    %v118 = vsub.f32 %v100, %v116
    %v119 = vmul.f32 %v117, 1.442695
    %v120 = vpow.pop %v119
    %v121 = vmul.f32 %v118, 1.442695
    %v122 = vpow.pop %v121
    %v123 = vsel %vm102, %v120, 0.0
    %v124 = vrot.slane %v123, 4
    %v125 = vadd.f32 %v123, %v124
    %v126 = vrot.slane %v125, 2
    %v127 = vadd.f32 %v125, %v126
    %v128 = vrot.slane %v127, 1
    %v129 = vadd.f32 %v127, %v128
    %v130 = vsel %vm102, %v122, 0.0
    %v131 = vrot.slane %v130, 4
    %v132 = vadd.f32 %v130, %v131
    %v133 = vrot.slane %v132, 2
    %v134 = vadd.f32 %v132, %v133
    %v135 = vrot.slane %v134, 1
    %v136 = vadd.f32 %v134, %v135
    %v137 = vrcp.pop %v129
    %v138 = vrcp.pop %v136
    %v139 = vmul.f32 %v120, %v137
    %v140 = vmul.f32 %v122, %v138
    %v143 = vcombine.low %v139, %v140
    %vm144 = vcmask 130048
    %v145 = vsel %vm144, %v143, 0
    %147 = vmatprep.subr.mxu0 0.0
    %148 = vmatpush1.msra.mxu0 %v15
    %149 = vmatprep.subr.mxu0 0.0
    %150 = vmatpush1.msra.mxu0 %v16
    %151 = vmatprep.subr.mxu0 0.0
    %152 = vmatpush1.msra.mxu0 0.0
    %153 = vmatprep.subr.mxu0 0.0
    %154 = vmatpush1.msra.mxu0 0.0
    %155 = vmatprep.subr.mxu0 0.0
    %156 = vmatpush1.msra.mxu0 0.0
    %157 = vmatprep.subr.mxu0 0.0
    %158 = vmatpush1.msra.mxu0 0.0
    %159 = vmatprep.subr.mxu0 0.0
    %160 = vmatpush1.msra.mxu0 0.0
    %161 = vmatprep.subr.mxu0 0.0
    %162 = vmatpush1.msra.mxu0 0.0
    %163 = vmatprep.subr.mxu0 0.0
    %164 = vmatpush1.msra.mxu0 0.0
    %165 = vmatprep.subr.mxu0 0.0
    %166 = vmatpush1.msra.mxu0 0.0
    %167 = vmatprep.subr.mxu0 0.0
    %168 = vmatpush1.msra.mxu0 0.0
    %169 = vmatprep.subr.mxu0 0.0
    %170 = vmatpush1.msra.mxu0 0.0
    %171 = vmatprep.subr.mxu0 0.0
    %172 = vmatpush1.msra.mxu0 0.0
    %173 = vmatprep.subr.mxu0 0.0
    %174 = vmatpush1.msra.mxu0 0.0
    %175 = vmatprep.subr.mxu0 0.0
    %176 = vmatpush1.msra.mxu0 0.0
    %177 = vmatprep.subr.mxu0 0.0
    %178 = vmatpush1.msra.mxu0 0.0
    %179 = vmatprep.subr.mxu0 0.0
    %180 = vmatpush1.msra.mxu0 0.0
    %181 = vmatprep.subr.mxu0 0.0
    %182 = vmatpush1.msra.mxu0 0.0
    %183 = vmatprep.subr.mxu0 0.0
    %184 = vmatpush1.msra.mxu0 0.0
    %185 = vmatprep.subr.mxu0 0.0
    %186 = vmatpush1.msra.mxu0 0.0
    %187 = vmatprep.subr.mxu0 0.0
    %188 = vmatpush1.msra.mxu0 0.0
    %189 = vmatprep.subr.mxu0 0.0
    %190 = vmatpush1.msra.mxu0 0.0
    %191 = vmatprep.subr.mxu0 0.0
    %192 = vmatpush1.msra.mxu0 0.0
    %193 = vmatprep.subr.mxu0 0.0
    %194 = vmatpush1.msra.mxu0 0.0
    %195 = vmatprep.subr.mxu0 0.0
    %196 = vmatpush1.msra.mxu0 0.0
    %197 = vmatprep.subr.mxu0 0.0
    %198 = vmatpush1.msra.mxu0 0.0
    %199 = vmatprep.subr.mxu0 0.0
    %200 = vmatpush1.msra.mxu0 0.0
    %201 = vmatprep.subr.mxu0 0.0
    %202 = vmatpush1.msra.mxu0 0.0
    %203 = vmatprep.subr.mxu0 0.0
    %204 = vmatpush1.msra.mxu0 0.0
    %205 = vmatprep.subr.mxu0 0.0
    %206 = vmatpush1.msra.mxu0 0.0
    %207 = vmatprep.subr.mxu0 0.0
    %208 = vmatpush1.msra.mxu0 0.0
    %209 = vmatprep.subr.mxu0 0.0
    %210 = vmatpush1.msra.mxu0 0.0
    %211 = vmatprep.mubr.f32.mxu0 0.0
    %212 = vmatmul.mubr.f32.gmra.mrb[0].mxu0 %v145
    %v213 = vpop.f32.mrb[0].mxu0
    %v214 = vadd.f32 0.0, %v213
    %v215 = vpop.f32.mrb[0].mxu0
    %216 = vdwg.mxu0
    %v218 = vcombine.high %v214, %v214
    %v220 = vadd.f32 %v12, %v214
    %v221 = vadd.f32 %v13, %v218
    %vm222 = vcmask 60416
    %v223 = vsel %vm222, %v220, 0.0
    %224 = vadd.xlane.f32.xlu0 %v223
    %v225 = vpop.xlane.xlu0 %224
    %v226 = vsel %vm222, %v221, 0.0
    %227 = vadd.xlane.f32.xlu0 %v226
    %v228 = vpop.xlane.xlu0 %227
    %v229 = vrcp.pop 8.0
    %v230 = vmul.f32 %v225, %v229
    %v231 = vmul.f32 %v228, %v229
    %v232 = vsub.f32 %v220, %v230
    %v233 = vsub.f32 %v221, %v231
    %v234 = vmul.f32 %v232, %v232
    %v235 = vmul.f32 %v233, %v233
    %v236 = vsel %vm222, %v234, 0.0
    %237 = vadd.xlane.f32.xlu0 %v236
    %v238 = vpop.xlane.xlu0 %237
    %v239 = vsel %vm222, %v235, 0.0
    %240 = vadd.xlane.f32.xlu0 %v239
    %v241 = vpop.xlane.xlu0 %240
    %v242 = vmul.f32 %v238, %v229
    %v243 = vmul.f32 %v241, %v229
    %v244 = vadd.f32 %v242, 1e-05
    %v245 = vadd.f32 %v243, 1e-05
    %v246 = vrsqrt.pop %v244
    %v247 = vrsqrt.pop %v245
    %v248 = vmul.f32 %v232, %v246
    %v249 = vmul.f32 %v233, %v247
    %v250 = vlaneseq
    %v251 = vshrl.u32 %v250, 7
    %v252 = vsub.s32 0, %v251
    %v253 = vrot.slane %v19, %v252
    %v254 = vmul.f32 %v248, %v253
    %v255 = vmul.f32 %v249, %v253
    %v256 = vlaneseq
    %v257 = vshrl.u32 %v256, 7
    %v258 = vsub.s32 0, %v257
    %v259 = vrot.slane %v20, %v258
    %v260 = vadd.f32 %v254, %v259
    %v261 = vadd.f32 %v255, %v259
    %v262 = vlaneseq
    %v263 = vshrl.u32 %v262, 7
    %v264 = vsub.s32 0, %v263
    %v265 = vrot.slane %v18, %v264
    %v268 = vcombine.low %v260, %v261
    %v270 = vcombine.low %v265, %v265
    %v272 = vsel %vm26, %v268, 0
    %274 = vmatprep.subr.mxu0 0.0
    %275 = vmatpush1.msra.mxu0 %v17
    %276 = vmatprep.subr.mxu0 0.0
    %277 = vmatpush1.msra.mxu0 0.0
    %278 = vmatprep.subr.mxu0 0.0
    %279 = vmatpush1.msra.mxu0 0.0
    %280 = vmatprep.subr.mxu0 0.0
    %281 = vmatpush1.msra.mxu0 0.0
    %282 = vmatprep.subr.mxu0 0.0
    %283 = vmatpush1.msra.mxu0 0.0
    %284 = vmatprep.subr.mxu0 0.0
    %285 = vmatpush1.msra.mxu0 0.0
    %286 = vmatprep.subr.mxu0 0.0
    %287 = vmatpush1.msra.mxu0 0.0
    %288 = vmatprep.subr.mxu0 0.0
    %289 = vmatpush1.msra.mxu0 0.0
    %290 = vmatprep.subr.mxu0 0.0
    %291 = vmatpush1.msra.mxu0 0.0
    %292 = vmatprep.subr.mxu0 0.0
    %293 = vmatpush1.msra.mxu0 0.0
    %294 = vmatprep.subr.mxu0 0.0
    %295 = vmatpush1.msra.mxu0 0.0
    %296 = vmatprep.subr.mxu0 0.0
    %297 = vmatpush1.msra.mxu0 0.0
    %298 = vmatprep.subr.mxu0 0.0
    %299 = vmatpush1.msra.mxu0 0.0
    %300 = vmatprep.subr.mxu0 0.0
    %301 = vmatpush1.msra.mxu0 0.0
    %302 = vmatprep.subr.mxu0 0.0
    %303 = vmatpush1.msra.mxu0 0.0
    %304 = vmatprep.subr.mxu0 0.0
    %305 = vmatpush1.msra.mxu0 0.0
    %306 = vmatprep.subr.mxu0 0.0
    %307 = vmatpush1.msra.mxu0 0.0
    %308 = vmatprep.subr.mxu0 0.0
    %309 = vmatpush1.msra.mxu0 0.0
    %310 = vmatprep.subr.mxu0 0.0
    %311 = vmatpush1.msra.mxu0 0.0
    %312 = vmatprep.subr.mxu0 0.0
    %313 = vmatpush1.msra.mxu0 0.0
    %314 = vmatprep.subr.mxu0 0.0
    %315 = vmatpush1.msra.mxu0 0.0
    %316 = vmatprep.subr.mxu0 0.0
    %317 = vmatpush1.msra.mxu0 0.0
    %318 = vmatprep.subr.mxu0 0.0
    %319 = vmatpush1.msra.mxu0 0.0
    %320 = vmatprep.subr.mxu0 0.0
    %321 = vmatpush1.msra.mxu0 0.0
    %322 = vmatprep.subr.mxu0 0.0
    %323 = vmatpush1.msra.mxu0 0.0
    %324 = vmatprep.subr.mxu0 0.0
    %325 = vmatpush1.msra.mxu0 0.0
    %326 = vmatprep.subr.mxu0 0.0
    %327 = vmatpush1.msra.mxu0 0.0
    %328 = vmatprep.subr.mxu0 0.0
    %329 = vmatpush1.msra.mxu0 0.0
    %330 = vmatprep.subr.mxu0 0.0
    %331 = vmatpush1.msra.mxu0 0.0
    %332 = vmatprep.subr.mxu0 0.0
    %333 = vmatpush1.msra.mxu0 0.0
    %334 = vmatprep.subr.mxu0 0.0
    %335 = vmatpush1.msra.mxu0 0.0
    %336 = vmatprep.subr.mxu0 0.0
    %337 = vmatpush1.msra.mxu0 0.0
    %338 = vmatprep.mubr.f32.mxu0 0.0
    %339 = vmatmul.mubr.f32.gmra.mrb[0].mxu0 %v272
    %v340 = vpop.f32.mrb[0].mxu0
    %v341 = vadd.f32 %v270, %v340
    %v342 = vpop.f32.mrb[0].mxu0
    %343 = vdwg.mxu0
    %v345 = vcombine.high %v341, %v341
    %v347 = vadd.f32 %v260, %v341
    %v348 = vadd.f32 %v261, %v345
    %v349 = vsel %vm222, %v347, 0.0
    %350 = vadd.xlane.f32.xlu0 %v349
    %v351 = vpop.xlane.xlu0 %350
    %v352 = vsel %vm222, %v348, 0.0
    %353 = vadd.xlane.f32.xlu0 %v352
    %v354 = vpop.xlane.xlu0 %353
    %v355 = vmul.f32 %v351, %v229
    %v356 = vmul.f32 %v354, %v229
    %v357 = vsub.f32 %v347, %v355
    %v358 = vsub.f32 %v348, %v356
    %v359 = vmul.f32 %v357, %v357
    %v360 = vmul.f32 %v358, %v358
    %v361 = vsel %vm222, %v359, 0.0
    %362 = vadd.xlane.f32.xlu0 %v361
    %v363 = vpop.xlane.xlu0 %362
    %v364 = vsel %vm222, %v360, 0.0
    %365 = vadd.xlane.f32.xlu0 %v364
    %v366 = vpop.xlane.xlu0 %365
    %v367 = vmul.f32 %v363, %v229
    %v368 = vmul.f32 %v366, %v229
    %v369 = vadd.f32 %v367, 1e-05
    %v370 = vadd.f32 %v368, 1e-05
    %v371 = vrsqrt.pop %v369
    %v372 = vrsqrt.pop %v370
    %v373 = vmul.f32 %v357, %v371
    %v374 = vmul.f32 %v358, %v372
    %v375 = vlaneseq
    %v376 = vshrl.u32 %v375, 7
    %v377 = vsub.s32 0, %v376
    %v378 = vrot.slane %v21, %v377
    %v379 = vmul.f32 %v373, %v378
    %v380 = vmul.f32 %v374, %v378
    %v381 = vlaneseq
    %v382 = vshrl.u32 %v381, 7
    %v383 = vsub.s32 0, %v382
    %v384 = vrot.slane %v22, %v383
    %v385 = vadd.f32 %v379, %v384
    %v386 = vadd.f32 %v380, %v384
    %v387 = vld [vmem:[%s1 + $0x48] sm:$0xff]
    %v388 = vld [vmem:[%s1 + $0x50] sm:$0xff]
    %v389 = vld [vmem:[%s1 + $0x58] sm:$0xff]
    %v390 = vld [vmem:[%s1 + $0x60] sm:$0xff]
    %v391 = vld [vmem:[%s1 + $0x68] sm:$0x1]
    %v392 = vld [vmem:[%s1 + $0x70] sm:$0x1]
    %v393 = vld [vmem:[%s1 + $0x78] sm:$0x1]
    %v394 = vld [vmem:[%s1 + $0x80] sm:$0x1]
    %v395 = vld [vmem:[%s1 + $0x88] sm:$0x1]
    %v398 = vcombine.low %v385, %v386
    %v399 = vsel %vm26, %v398, 0
    %401 = vmatprep.subr.mxu0 0.0
    %402 = vmatpush1.msra.mxu0 %v387
    %403 = vmatprep.subr.mxu0 0.0
    %404 = vmatpush1.msra.mxu0 0.0
    %405 = vmatprep.subr.mxu0 0.0
    %406 = vmatpush1.msra.mxu0 0.0
    %407 = vmatprep.subr.mxu0 0.0
    %408 = vmatpush1.msra.mxu0 0.0
    %409 = vmatprep.subr.mxu0 0.0
    %410 = vmatpush1.msra.mxu0 0.0
    %411 = vmatprep.subr.mxu0 0.0
    %412 = vmatpush1.msra.mxu0 0.0
    %413 = vmatprep.subr.mxu0 0.0
    %414 = vmatpush1.msra.mxu0 0.0
    %415 = vmatprep.subr.mxu0 0.0
    %416 = vmatpush1.msra.mxu0 0.0
    %417 = vmatprep.subr.mxu0 0.0
    %418 = vmatpush1.msra.mxu0 0.0
    %419 = vmatprep.subr.mxu0 0.0
    %420 = vmatpush1.msra.mxu0 0.0
    %421 = vmatprep.subr.mxu0 0.0
    %422 = vmatpush1.msra.mxu0 0.0
    %423 = vmatprep.subr.mxu0 0.0
    %424 = vmatpush1.msra.mxu0 0.0
    %425 = vmatprep.subr.mxu0 0.0
    %426 = vmatpush1.msra.mxu0 0.0
    %427 = vmatprep.subr.mxu0 0.0
    %428 = vmatpush1.msra.mxu0 0.0
    %429 = vmatprep.subr.mxu0 0.0
    %430 = vmatpush1.msra.mxu0 0.0
    %431 = vmatprep.subr.mxu0 0.0
    %432 = vmatpush1.msra.mxu0 0.0
    %433 = vmatprep.subr.mxu0 0.0
    %434 = vmatpush1.msra.mxu0 0.0
    %435 = vmatprep.subr.mxu0 0.0
    %436 = vmatpush1.msra.mxu0 0.0
    %437 = vmatprep.subr.mxu0 0.0
    %438 = vmatpush1.msra.mxu0 0.0
    %439 = vmatprep.subr.mxu0 0.0
    %440 = vmatpush1.msra.mxu0 0.0
    %441 = vmatprep.subr.mxu0 0.0
    %442 = vmatpush1.msra.mxu0 0.0
    %443 = vmatprep.subr.mxu0 0.0
    %444 = vmatpush1.msra.mxu0 0.0
    %445 = vmatprep.subr.mxu0 0.0
    %446 = vmatpush1.msra.mxu0 0.0
    %447 = vmatprep.subr.mxu0 0.0
    %448 = vmatpush1.msra.mxu0 0.0
    %449 = vmatprep.subr.mxu0 0.0
    %450 = vmatpush1.msra.mxu0 0.0
    %451 = vmatprep.subr.mxu0 0.0
    %452 = vmatpush1.msra.mxu0 0.0
    %453 = vmatprep.subr.mxu0 0.0
    %454 = vmatpush1.msra.mxu0 0.0
    %455 = vmatprep.subr.mxu0 0.0
    %456 = vmatpush1.msra.mxu0 0.0
    %457 = vmatprep.subr.mxu0 0.0
    %458 = vmatpush1.msra.mxu0 0.0
    %459 = vmatprep.subr.mxu0 0.0
    %460 = vmatpush1.msra.mxu0 0.0
    %461 = vmatprep.subr.mxu0 0.0
    %462 = vmatpush1.msra.mxu0 0.0
    %463 = vmatprep.subr.mxu0 0.0
    %464 = vmatpush1.msra.mxu0 0.0
    %465 = vmatprep.mubr.f32.mxu0 0.0
    %466 = vmatmul.mubr.f32.gmra.mrb[0].mxu0 %v399
    %v467 = vpop.f32.mrb[0].mxu0
    %v468 = vadd.f32 0.0, %v467
    %v469 = vpop.f32.mrb[0].mxu0
    %470 = vdwg.mxu0
    %v472 = vcombine.high %v468, %v468
    %v474 = vsel %vm102, %v468, -inf
    %v475 = vrot.slane %v474, 4
    %v476 = vmax.f32 %v474, %v475
    %v477 = vrot.slane %v476, 2
    %v478 = vmax.f32 %v476, %v477
    %v479 = vrot.slane %v478, 1
    %v480 = vmax.f32 %v478, %v479
    %v481 = vsel %vm102, %v472, -inf
    %v482 = vrot.slane %v481, 4
    %v483 = vmax.f32 %v481, %v482
    %v484 = vrot.slane %v483, 2
    %v485 = vmax.f32 %v483, %v484
    %v486 = vrot.slane %v485, 1
    %v487 = vmax.f32 %v485, %v486
    %v488 = vsub.f32 %v468, %v480
    %v489 = vsub.f32 %v472, %v487
    %v490 = vmul.f32 %v488, 1.442695
    %v491 = vpow.pop %v490
    %v492 = vmul.f32 %v489, 1.442695
    %v493 = vpow.pop %v492
    %v494 = vsel %vm102, %v491, 0.0
    %v495 = vrot.slane %v494, 4
    %v496 = vadd.f32 %v494, %v495
    %v497 = vrot.slane %v496, 2
    %v498 = vadd.f32 %v496, %v497
    %v499 = vrot.slane %v498, 1
    %v500 = vadd.f32 %v498, %v499
    %v501 = vsel %vm102, %v493, 0.0
    %v502 = vrot.slane %v501, 4
    %v503 = vadd.f32 %v501, %v502
    %v504 = vrot.slane %v503, 2
    %v505 = vadd.f32 %v503, %v504
    %v506 = vrot.slane %v505, 1
    %v507 = vadd.f32 %v505, %v506
    %v508 = vrcp.pop %v500
    %v509 = vrcp.pop %v507
    %v510 = vmul.f32 %v491, %v508
    %v511 = vmul.f32 %v493, %v509
    %v514 = vcombine.low %v510, %v511
    %v515 = vsel %vm144, %v514, 0
    %517 = vmatprep.subr.mxu0 0.0
    %518 = vmatpush1.msra.mxu0 %v388
    %519 = vmatprep.subr.mxu0 0.0
    %520 = vmatpush1.msra.mxu0 %v389
    %521 = vmatprep.subr.mxu0 0.0
    %522 = vmatpush1.msra.mxu0 0.0
    %523 = vmatprep.subr.mxu0 0.0
    %524 = vmatpush1.msra.mxu0 0.0
    %525 = vmatprep.subr.mxu0 0.0
    %526 = vmatpush1.msra.mxu0 0.0
    %527 = vmatprep.subr.mxu0 0.0
    %528 = vmatpush1.msra.mxu0 0.0
    %529 = vmatprep.subr.mxu0 0.0
    %530 = vmatpush1.msra.mxu0 0.0
    %531 = vmatprep.subr.mxu0 0.0
    %532 = vmatpush1.msra.mxu0 0.0
    %533 = vmatprep.subr.mxu0 0.0
    %534 = vmatpush1.msra.mxu0 0.0
    %535 = vmatprep.subr.mxu0 0.0
    %536 = vmatpush1.msra.mxu0 0.0
    %537 = vmatprep.subr.mxu0 0.0
    %538 = vmatpush1.msra.mxu0 0.0
    %539 = vmatprep.subr.mxu0 0.0
    %540 = vmatpush1.msra.mxu0 0.0
    %541 = vmatprep.subr.mxu0 0.0
    %542 = vmatpush1.msra.mxu0 0.0
    %543 = vmatprep.subr.mxu0 0.0
    %544 = vmatpush1.msra.mxu0 0.0
    %545 = vmatprep.subr.mxu0 0.0
    %546 = vmatpush1.msra.mxu0 0.0
    %547 = vmatprep.subr.mxu0 0.0
    %548 = vmatpush1.msra.mxu0 0.0
    %549 = vmatprep.subr.mxu0 0.0
    %550 = vmatpush1.msra.mxu0 0.0
    %551 = vmatprep.subr.mxu0 0.0
    %552 = vmatpush1.msra.mxu0 0.0
    %553 = vmatprep.subr.mxu0 0.0
    %554 = vmatpush1.msra.mxu0 0.0
    %555 = vmatprep.subr.mxu0 0.0
    %556 = vmatpush1.msra.mxu0 0.0
    %557 = vmatprep.subr.mxu0 0.0
    %558 = vmatpush1.msra.mxu0 0.0
    %559 = vmatprep.subr.mxu0 0.0
    %560 = vmatpush1.msra.mxu0 0.0
    %561 = vmatprep.subr.mxu0 0.0
    %562 = vmatpush1.msra.mxu0 0.0
    %563 = vmatprep.subr.mxu0 0.0
    %564 = vmatpush1.msra.mxu0 0.0
    %565 = vmatprep.subr.mxu0 0.0
    %566 = vmatpush1.msra.mxu0 0.0
    %567 = vmatprep.subr.mxu0 0.0
    %568 = vmatpush1.msra.mxu0 0.0
    %569 = vmatprep.subr.mxu0 0.0
    %570 = vmatpush1.msra.mxu0 0.0
    %571 = vmatprep.subr.mxu0 0.0
    %572 = vmatpush1.msra.mxu0 0.0
    %573 = vmatprep.subr.mxu0 0.0
    %574 = vmatpush1.msra.mxu0 0.0
    %575 = vmatprep.subr.mxu0 0.0
    %576 = vmatpush1.msra.mxu0 0.0
    %577 = vmatprep.subr.mxu0 0.0
    %578 = vmatpush1.msra.mxu0 0.0
    %579 = vmatprep.subr.mxu0 0.0
    %580 = vmatpush1.msra.mxu0 0.0
    %581 = vmatprep.mubr.f32.mxu0 0.0
    %582 = vmatmul.mubr.f32.gmra.mrb[0].mxu0 %v515
    %v583 = vpop.f32.mrb[0].mxu0
    %v584 = vadd.f32 0.0, %v583
    %v585 = vpop.f32.mrb[0].mxu0
    %586 = vdwg.mxu0
    %v588 = vcombine.high %v584, %v584
    %v590 = vadd.f32 %v385, %v584
    %v591 = vadd.f32 %v386, %v588
    %v592 = vsel %vm222, %v590, 0.0
    %593 = vadd.xlane.f32.xlu0 %v592
    %v594 = vpop.xlane.xlu0 %593
    %v595 = vsel %vm222, %v591, 0.0
    %596 = vadd.xlane.f32.xlu0 %v595
    %v597 = vpop.xlane.xlu0 %596
    %v598 = vmul.f32 %v594, %v229
    %v599 = vmul.f32 %v597, %v229
    %v600 = vsub.f32 %v590, %v598
    %v601 = vsub.f32 %v591, %v599
    %v602 = vmul.f32 %v600, %v600
    %v603 = vmul.f32 %v601, %v601
    %v604 = vsel %vm222, %v602, 0.0
    %605 = vadd.xlane.f32.xlu0 %v604
    %v606 = vpop.xlane.xlu0 %605
    %v607 = vsel %vm222, %v603, 0.0
    %608 = vadd.xlane.f32.xlu0 %v607
    %v609 = vpop.xlane.xlu0 %608
    %v610 = vmul.f32 %v606, %v229
    %v611 = vmul.f32 %v609, %v229
    %v612 = vadd.f32 %v610, 1e-05
    %v613 = vadd.f32 %v611, 1e-05
    %v614 = vrsqrt.pop %v612
    %v615 = vrsqrt.pop %v613
    %v616 = vmul.f32 %v600, %v614
    %v617 = vmul.f32 %v601, %v615
    %v618 = vlaneseq
    %v619 = vshrl.u32 %v618, 7
    %v620 = vsub.s32 0, %v619
    %v621 = vrot.slane %v392, %v620
    %v622 = vmul.f32 %v616, %v621
    %v623 = vmul.f32 %v617, %v621
    %v624 = vlaneseq
    %v625 = vshrl.u32 %v624, 7
    %v626 = vsub.s32 0, %v625
    %v627 = vrot.slane %v393, %v626
    %v628 = vadd.f32 %v622, %v627
    %v629 = vadd.f32 %v623, %v627
    %v630 = vlaneseq
    %v631 = vshrl.u32 %v630, 7
    %v632 = vsub.s32 0, %v631
    %v633 = vrot.slane %v391, %v632
    %v636 = vcombine.low %v628, %v629
    %v638 = vcombine.low %v633, %v633
    %v640 = vsel %vm26, %v636, 0
    %642 = vmatprep.subr.mxu0 0.0
    %643 = vmatpush1.msra.mxu0 %v390
    %644 = vmatprep.subr.mxu0 0.0
    %645 = vmatpush1.msra.mxu0 0.0
    %646 = vmatprep.subr.mxu0 0.0
    %647 = vmatpush1.msra.mxu0 0.0
    %648 = vmatprep.subr.mxu0 0.0
    %649 = vmatpush1.msra.mxu0 0.0
    %650 = vmatprep.subr.mxu0 0.0
    %651 = vmatpush1.msra.mxu0 0.0
    %652 = vmatprep.subr.mxu0 0.0
    %653 = vmatpush1.msra.mxu0 0.0
    %654 = vmatprep.subr.mxu0 0.0
    %655 = vmatpush1.msra.mxu0 0.0
    %656 = vmatprep.subr.mxu0 0.0
    %657 = vmatpush1.msra.mxu0 0.0
    %658 = vmatprep.subr.mxu0 0.0
    %659 = vmatpush1.msra.mxu0 0.0
    %660 = vmatprep.subr.mxu0 0.0
    %661 = vmatpush1.msra.mxu0 0.0
    %662 = vmatprep.subr.mxu0 0.0
    %663 = vmatpush1.msra.mxu0 0.0
    %664 = vmatprep.subr.mxu0 0.0
    %665 = vmatpush1.msra.mxu0 0.0
    %666 = vmatprep.subr.mxu0 0.0
    %667 = vmatpush1.msra.mxu0 0.0
    %668 = vmatprep.subr.mxu0 0.0
    %669 = vmatpush1.msra.mxu0 0.0
    %670 = vmatprep.subr.mxu0 0.0
    %671 = vmatpush1.msra.mxu0 0.0
    %672 = vmatprep.subr.mxu0 0.0
    %673 = vmatpush1.msra.mxu0 0.0
    %674 = vmatprep.subr.mxu0 0.0
    %675 = vmatpush1.msra.mxu0 0.0
    %676 = vmatprep.subr.mxu0 0.0
    %677 = vmatpush1.msra.mxu0 0.0
    %678 = vmatprep.subr.mxu0 0.0
    %679 = vmatpush1.msra.mxu0 0.0
    %680 = vmatprep.subr.mxu0 0.0
    %681 = vmatpush1.msra.mxu0 0.0
    %682 = vmatprep.subr.mxu0 0.0
    %683 = vmatpush1.msra.mxu0 0.0
    %684 = vmatprep.subr.mxu0 0.0
    %685 = vmatpush1.msra.mxu0 0.0
    %686 = vmatprep.subr.mxu0 0.0
    %687 = vmatpush1.msra.mxu0 0.0
    %688 = vmatprep.subr.mxu0 0.0
    %689 = vmatpush1.msra.mxu0 0.0
    %690 = vmatprep.subr.mxu0 0.0
    %691 = vmatpush1.msra.mxu0 0.0
    %692 = vmatprep.subr.mxu0 0.0
    %693 = vmatpush1.msra.mxu0 0.0
    %694 = vmatprep.subr.mxu0 0.0
    %695 = vmatpush1.msra.mxu0 0.0
    %696 = vmatprep.subr.mxu0 0.0
    %697 = vmatpush1.msra.mxu0 0.0
    %698 = vmatprep.subr.mxu0 0.0
    %699 = vmatpush1.msra.mxu0 0.0
    %700 = vmatprep.subr.mxu0 0.0
    %701 = vmatpush1.msra.mxu0 0.0
    %702 = vmatprep.subr.mxu0 0.0
    %703 = vmatpush1.msra.mxu0 0.0
    %704 = vmatprep.subr.mxu0 0.0
    %705 = vmatpush1.msra.mxu0 0.0
    %706 = vmatprep.mubr.f32.mxu0 0.0
    %707 = vmatmul.mubr.f32.gmra.mrb[0].mxu0 %v640
    %v708 = vpop.f32.mrb[0].mxu0
    %v709 = vadd.f32 %v638, %v708
    %v710 = vpop.f32.mrb[0].mxu0
    %711 = vdwg.mxu0
    %v713 = vcombine.high %v709, %v709
    %v715 = vadd.f32 %v628, %v709
    %v716 = vadd.f32 %v629, %v713
    %v717 = vsel %vm222, %v715, 0.0
    %718 = vadd.xlane.f32.xlu0 %v717
    %v719 = vpop.xlane.xlu0 %718
    %v720 = vsel %vm222, %v716, 0.0
    %721 = vadd.xlane.f32.xlu0 %v720
    %v722 = vpop.xlane.xlu0 %721
    %v723 = vmul.f32 %v719, %v229
    %v724 = vmul.f32 %v722, %v229
    %v725 = vsub.f32 %v715, %v723
    %v726 = vsub.f32 %v716, %v724
    %v727 = vmul.f32 %v725, %v725
    %v728 = vmul.f32 %v726, %v726
    %v729 = vsel %vm222, %v727, 0.0
    %730 = vadd.xlane.f32.xlu0 %v729
    %v731 = vpop.xlane.xlu0 %730
    %v732 = vsel %vm222, %v728, 0.0
    %733 = vadd.xlane.f32.xlu0 %v732
    %v734 = vpop.xlane.xlu0 %733
    %v735 = vmul.f32 %v731, %v229
    %v736 = vmul.f32 %v734, %v229
    %v737 = vadd.f32 %v735, 1e-05
    %v738 = vadd.f32 %v736, 1e-05
    %v739 = vrsqrt.pop %v737
    %v740 = vrsqrt.pop %v738
    %v741 = vmul.f32 %v725, %v739
    %v742 = vmul.f32 %v726, %v740
    %v743 = vlaneseq
    %v744 = vshrl.u32 %v743, 7
    %v745 = vsub.s32 0, %v744
    %v746 = vrot.slane %v394, %v745
    %v747 = vmul.f32 %v741, %v746
    %v748 = vmul.f32 %v742, %v746
    %v749 = vlaneseq
    %v750 = vshrl.u32 %v749, 7
    %v751 = vsub.s32 0, %v750
    %v752 = vrot.slane %v395, %v751
    %v753 = vadd.f32 %v747, %v752
    %v755 = vunpack.c.l.s4 1983009808
    %v756 = vunpack.c.0.s8 %v755
    %v757 = vlaneseq
    %v758 = vshrl.u32 %v757, 7
    %v759 = vsub.s32 %v756, %v758
    %v760 = vrot.slane %v753, %v759
    %v761 = vadd.f32 %v748, %v752
    %v763 = vunpack.c.l.s4 1983009808
    %v764 = vunpack.c.0.s8 %v763
    %v765 = vlaneseq
    %v766 = vshrl.u32 %v765, 7
    %v767 = vsub.s32 %v764, %v766
    %v768 = vrot.slane %v761, %v767
    %v769 = vcombine.low %v760, %v768
    %v770 = vcombine.high %v760, %v768
    %v772 = vunpack.c.l.s4 1934713408
    %v773 = vunpack.c.0.s8 %v772
    %v774 = vlaneseq
    %v775 = vshrl.u32 %v774, 7
    %v776 = vsub.s32 %v773, %v775
    %v777 = vrot.slane %v769, %v776
    %v779 = vunpack.c.l.s4 1934713408
    %v780 = vunpack.c.0.s8 %v779
    %v781 = vlaneseq
    %v782 = vshrl.u32 %v781, 7
    %v783 = vsub.s32 %v780, %v782
    %v784 = vrot.slane %v770, %v783
    %v785 = vcombine.high %v777, 0.0
    %v786 = vcombine.high %v784, 0.0
    %788 = vrot.lane.b32.xlu0 %v785, 8
    %v789 = vpop.permute.xlu0 %788
    %792 = vrot.lane.b32.xlu0 %v784, 16
    %v793 = vpop.permute.xlu0 %792
    %796 = vrot.lane.b32.xlu0 %v786, 24
    %v797 = vpop.permute.xlu0 %796
    %v799 = vsel %vm26, %v777, %v789
    %v800 = vsel %vm144, %v799, %v793
    %vm801 = vcmask 195584
    %v802 = vsel %vm801, %v800, %v797
    %v803 = vld [vmem:[%s1 + $0x90] sm:$0xff]
    %v804 = vld [vmem:[%s1 + $0x98] sm:$0xff]
    %v805 = vld [vmem:[%s1 + $0xa0] sm:$0xff]
    %v806 = vld [vmem:[%s1 + $0xa8] sm:$0xff]
    %v807 = vld [vmem:[%s1 + $0xb0] sm:$0x1]
    %v808 = vld [vmem:[%s1 + $0xb8] sm:$0xff]
    %v809 = vld [vmem:[%s1 + $0xc0] sm:$0xff]
    %v810 = vld [vmem:[%s1 + $0xc8] sm:$0xff]
    %v811 = vld [vmem:[%s1 + $0xd0] sm:$0xff]
    %v812 = vld [vmem:[%s1 + $0xd8] sm:$0x1]
    %v813 = vlaneseq
    %v814 = vshrl.u32 %v813, 7
    %v815 = vsub.s32 0, %v814
    %v816 = vrot.slane %v807, %v815
    %vm817 = vcmask 261120
    %v819 = vsel %vm817, %v802, 0
    %821 = vmatprep.subr.mxu0 0.0
    %822 = vmatpush1.msra.mxu0 %v803
    %823 = vmatprep.subr.mxu0 0.0
    %824 = vmatpush1.msra.mxu0 %v804
    %825 = vmatprep.subr.mxu0 0.0
    %826 = vmatpush1.msra.mxu0 %v805
    %827 = vmatprep.subr.mxu0 0.0
    %828 = vmatpush1.msra.mxu0 %v806
    %829 = vmatprep.subr.mxu0 0.0
    %830 = vmatpush1.msra.mxu0 0.0
    %831 = vmatprep.subr.mxu0 0.0
    %832 = vmatpush1.msra.mxu0 0.0
    %833 = vmatprep.subr.mxu0 0.0
    %834 = vmatpush1.msra.mxu0 0.0
    %835 = vmatprep.subr.mxu0 0.0
    %836 = vmatpush1.msra.mxu0 0.0
    %837 = vmatprep.subr.mxu0 0.0
    %838 = vmatpush1.msra.mxu0 0.0
    %839 = vmatprep.subr.mxu0 0.0
    %840 = vmatpush1.msra.mxu0 0.0
    %841 = vmatprep.subr.mxu0 0.0
    %842 = vmatpush1.msra.mxu0 0.0
    %843 = vmatprep.subr.mxu0 0.0
    %844 = vmatpush1.msra.mxu0 0.0
    %845 = vmatprep.subr.mxu0 0.0
    %846 = vmatpush1.msra.mxu0 0.0
    %847 = vmatprep.subr.mxu0 0.0
    %848 = vmatpush1.msra.mxu0 0.0
    %849 = vmatprep.subr.mxu0 0.0
    %850 = vmatpush1.msra.mxu0 0.0
    %851 = vmatprep.subr.mxu0 0.0
    %852 = vmatpush1.msra.mxu0 0.0
    %853 = vmatprep.subr.mxu0 0.0
    %854 = vmatpush1.msra.mxu0 0.0
    %855 = vmatprep.subr.mxu0 0.0
    %856 = vmatpush1.msra.mxu0 0.0
    %857 = vmatprep.subr.mxu0 0.0
    %858 = vmatpush1.msra.mxu0 0.0
    %859 = vmatprep.subr.mxu0 0.0
    %860 = vmatpush1.msra.mxu0 0.0
    %861 = vmatprep.subr.mxu0 0.0
    %862 = vmatpush1.msra.mxu0 0.0
    %863 = vmatprep.subr.mxu0 0.0
    %864 = vmatpush1.msra.mxu0 0.0
    %865 = vmatprep.subr.mxu0 0.0
    %866 = vmatpush1.msra.mxu0 0.0
    %867 = vmatprep.subr.mxu0 0.0
    %868 = vmatpush1.msra.mxu0 0.0
    %869 = vmatprep.subr.mxu0 0.0
    %870 = vmatpush1.msra.mxu0 0.0
    %871 = vmatprep.subr.mxu0 0.0
    %872 = vmatpush1.msra.mxu0 0.0
    %873 = vmatprep.subr.mxu0 0.0
    %874 = vmatpush1.msra.mxu0 0.0
    %875 = vmatprep.subr.mxu0 0.0
    %876 = vmatpush1.msra.mxu0 0.0
    %877 = vmatprep.subr.mxu0 0.0
    %878 = vmatpush1.msra.mxu0 0.0
    %879 = vmatprep.subr.mxu0 0.0
    %880 = vmatpush1.msra.mxu0 0.0
    %881 = vmatprep.subr.mxu0 0.0
    %882 = vmatpush1.msra.mxu0 0.0
    %883 = vmatprep.subr.mxu0 0.0
    %884 = vmatpush1.msra.mxu0 0.0
    %885 = vmatprep.mubr.f32.mxu0 0.0
    %886 = vmatmul.mubr.f32.gmra.mrb[0].mxu0 %v819
    %v887 = vpop.f32.mrb[0].mxu0
    %v888 = vadd.f32 %v816, %v887
    %v889 = vpop.f32.mrb[0].mxu0
    %890 = vdwg.mxu0
    %v891 = vmul.f32 %v888, 0.5
    %v892 = vmul.f32 %v888, 0.70710677
    %v893 = verf.f32.pop %v892
    %v894 = vadd.f32 %v893, 1.0
    %v895 = vmul.f32 %v891, %v894
    %v896 = vlaneseq
    %v897 = vshrl.u32 %v896, 7
    %v898 = vsub.s32 0, %v897
    %v899 = vrot.slane %v812, %v898
    %v901 = vsel %vm817, %v895, 0
    %903 = vmatprep.subr.mxu0 0.0
    %904 = vmatpush1.msra.mxu0 %v808
    %905 = vmatprep.subr.mxu0 0.0
    %906 = vmatpush1.msra.mxu0 %v809
    %907 = vmatprep.subr.mxu0 0.0
    %908 = vmatpush1.msra.mxu0 %v810
    %909 = vmatprep.subr.mxu0 0.0
    %910 = vmatpush1.msra.mxu0 %v811
    %911 = vmatprep.subr.mxu0 0.0
    %912 = vmatpush1.msra.mxu0 0.0
    %913 = vmatprep.subr.mxu0 0.0
    %914 = vmatpush1.msra.mxu0 0.0
    %915 = vmatprep.subr.mxu0 0.0
    %916 = vmatpush1.msra.mxu0 0.0
    %917 = vmatprep.subr.mxu0 0.0
    %918 = vmatpush1.msra.mxu0 0.0
    %919 = vmatprep.subr.mxu0 0.0
    %920 = vmatpush1.msra.mxu0 0.0
    %921 = vmatprep.subr.mxu0 0.0
    %922 = vmatpush1.msra.mxu0 0.0
    %923 = vmatprep.subr.mxu0 0.0
    %924 = vmatpush1.msra.mxu0 0.0
    %925 = vmatprep.subr.mxu0 0.0
    %926 = vmatpush1.msra.mxu0 0.0
    %927 = vmatprep.subr.mxu0 0.0
    %928 = vmatpush1.msra.mxu0 0.0
    %929 = vmatprep.subr.mxu0 0.0
    %930 = vmatpush1.msra.mxu0 0.0
    %931 = vmatprep.subr.mxu0 0.0
    %932 = vmatpush1.msra.mxu0 0.0
    %933 = vmatprep.subr.mxu0 0.0
    %934 = vmatpush1.msra.mxu0 0.0
    %935 = vmatprep.subr.mxu0 0.0
    %936 = vmatpush1.msra.mxu0 0.0
    %937 = vmatprep.subr.mxu0 0.0
    %938 = vmatpush1.msra.mxu0 0.0
    %939 = vmatprep.subr.mxu0 0.0
    %940 = vmatpush1.msra.mxu0 0.0
    %941 = vmatprep.subr.mxu0 0.0
    %942 = vmatpush1.msra.mxu0 0.0
    %943 = vmatprep.subr.mxu0 0.0
    %944 = vmatpush1.msra.mxu0 0.0
    %945 = vmatprep.subr.mxu0 0.0
    %946 = vmatpush1.msra.mxu0 0.0
    %947 = vmatprep.subr.mxu0 0.0
    %948 = vmatpush1.msra.mxu0 0.0
    %949 = vmatprep.subr.mxu0 0.0
    %950 = vmatpush1.msra.mxu0 0.0
    %951 = vmatprep.subr.mxu0 0.0
    %952 = vmatpush1.msra.mxu0 0.0
    %953 = vmatprep.subr.mxu0 0.0
    %954 = vmatpush1.msra.mxu0 0.0
    %955 = vmatprep.subr.mxu0 0.0
    %956 = vmatpush1.msra.mxu0 0.0
    %957 = vmatprep.subr.mxu0 0.0
    %958 = vmatpush1.msra.mxu0 0.0
    %959 = vmatprep.subr.mxu0 0.0
    %960 = vmatpush1.msra.mxu0 0.0
    %961 = vmatprep.subr.mxu0 0.0
    %962 = vmatpush1.msra.mxu0 0.0
    %963 = vmatprep.subr.mxu0 0.0
    %964 = vmatpush1.msra.mxu0 0.0
    %965 = vmatprep.subr.mxu0 0.0
    %966 = vmatpush1.msra.mxu0 0.0
    %967 = vmatprep.mubr.f32.mxu0 0.0
    %968 = vmatmul.mubr.f32.gmra.mrb[0].mxu0 %v901
    %v969 = vpop.f32.mrb[0].mxu0
    %v970 = vadd.f32 %v899, %v969
    %v971 = vpop.f32.mrb[0].mxu0
    %972 = vdwg.mxu0
    %v973 = vld [vmem:[%s1 + $0xe0] sm:$0xff]
    %v974 = vld [vmem:[%s1 + $0xe8] sm:$0xff]
    %v975 = vld [vmem:[%s1 + $0xf0] sm:$0x1]
    %v976 = vld [vmem:[%s1 + $0xf8] sm:$0xff]
    %v977 = vld [vmem:[%s1 + $0x100] sm:$0xff]
    %v978 = vld [vmem:[%s1 + $0x108] sm:$0xff]
    %v979 = vld [vmem:[%s1 + $0x110] sm:$0xff]
    %v980 = vld [vmem:[%s1 + $0x118] sm:$0x1]
    %v981 = vlaneseq
    %v982 = vshrl.u32 %v981, 7
    %v983 = vsub.s32 0, %v982
    %v984 = vrot.slane %v975, %v983
    %v986 = vsel %vm144, %v970, 0
    %988 = vmatprep.subr.mxu0 0.0
    %989 = vmatpush1.msra.mxu0 %v973
    %990 = vmatprep.subr.mxu0 0.0
    %991 = vmatpush1.msra.mxu0 %v974
    %992 = vmatprep.subr.mxu0 0.0
    %993 = vmatpush1.msra.mxu0 0.0
    %994 = vmatprep.subr.mxu0 0.0
    %995 = vmatpush1.msra.mxu0 0.0
    %996 = vmatprep.subr.mxu0 0.0
    %997 = vmatpush1.msra.mxu0 0.0
    %998 = vmatprep.subr.mxu0 0.0
    %999 = vmatpush1.msra.mxu0 0.0
    %1000 = vmatprep.subr.mxu0 0.0
    %1001 = vmatpush1.msra.mxu0 0.0
    %1002 = vmatprep.subr.mxu0 0.0
    %1003 = vmatpush1.msra.mxu0 0.0
    %1004 = vmatprep.subr.mxu0 0.0
    %1005 = vmatpush1.msra.mxu0 0.0
    %1006 = vmatprep.subr.mxu0 0.0
    %1007 = vmatpush1.msra.mxu0 0.0
    %1008 = vmatprep.subr.mxu0 0.0
    %1009 = vmatpush1.msra.mxu0 0.0
    %1010 = vmatprep.subr.mxu0 0.0
    %1011 = vmatpush1.msra.mxu0 0.0
    %1012 = vmatprep.subr.mxu0 0.0
    %1013 = vmatpush1.msra.mxu0 0.0
    %1014 = vmatprep.subr.mxu0 0.0
    %1015 = vmatpush1.msra.mxu0 0.0
    %1016 = vmatprep.subr.mxu0 0.0
    %1017 = vmatpush1.msra.mxu0 0.0
    %1018 = vmatprep.subr.mxu0 0.0
    %1019 = vmatpush1.msra.mxu0 0.0
    %1020 = vmatprep.subr.mxu0 0.0
    %1021 = vmatpush1.msra.mxu0 0.0
    %1022 = vmatprep.subr.mxu0 0.0
    %1023 = vmatpush1.msra.mxu0 0.0
    %1024 = vmatprep.subr.mxu0 0.0
    %1025 = vmatpush1.msra.mxu0 0.0
    %1026 = vmatprep.subr.mxu0 0.0
    %1027 = vmatpush1.msra.mxu0 0.0
    %1028 = vmatprep.subr.mxu0 0.0
    %1029 = vmatpush1.msra.mxu0 0.0
    %1030 = vmatprep.subr.mxu0 0.0
    %1031 = vmatpush1.msra.mxu0 0.0
    %1032 = vmatprep.subr.mxu0 0.0
    %1033 = vmatpush1.msra.mxu0 0.0
    %1034 = vmatprep.subr.mxu0 0.0
    %1035 = vmatpush1.msra.mxu0 0.0
    %1036 = vmatprep.subr.mxu0 0.0
    %1037 = vmatpush1.msra.mxu0 0.0
    %1038 = vmatprep.subr.mxu0 0.0
    %1039 = vmatpush1.msra.mxu0 0.0
    %1040 = vmatprep.subr.mxu0 0.0
    %1041 = vmatpush1.msra.mxu0 0.0
    %1042 = vmatprep.subr.mxu0 0.0
    %1043 = vmatpush1.msra.mxu0 0.0
    %1044 = vmatprep.subr.mxu0 0.0
    %1045 = vmatpush1.msra.mxu0 0.0
    %1046 = vmatprep.subr.mxu0 0.0
    %1047 = vmatpush1.msra.mxu0 0.0
    %1048 = vmatprep.subr.mxu0 0.0
    %1049 = vmatpush1.msra.mxu0 0.0
    %1050 = vmatprep.subr.mxu0 0.0
    %1051 = vmatpush1.msra.mxu0 0.0
    %1052 = vmatprep.mubr.f32.mxu0 0.0
    %1053 = vmatmul.mubr.f32.gmra.mrb[0].mxu0 %v986
    %v1054 = vpop.f32.mrb[0].mxu0
    %v1055 = vadd.f32 %v984, %v1054
    %v1056 = vpop.f32.mrb[0].mxu0
    %1057 = vdwg.mxu0
    %v1058 = vmul.f32 %v1055, 0.5
    %v1059 = vmul.f32 %v1055, 0.70710677
    %v1060 = verf.f32.pop %v1059
    %v1061 = vadd.f32 %v1060, 1.0
    %v1062 = vmul.f32 %v1058, %v1061
    %v1063 = vlaneseq
    %v1064 = vshrl.u32 %v1063, 7
    %v1065 = vsub.s32 0, %v1064
    %v1066 = vrot.slane %v980, %v1065
    %v1068 = vsel %vm817, %v1062, 0
    %1070 = vmatprep.subr.mxu0 0.0
    %1071 = vmatpush1.msra.mxu0 %v976
    %1072 = vmatprep.subr.mxu0 0.0
    %1073 = vmatpush1.msra.mxu0 %v977
    %1074 = vmatprep.subr.mxu0 0.0
    %1075 = vmatpush1.msra.mxu0 %v978
    %1076 = vmatprep.subr.mxu0 0.0
    %1077 = vmatpush1.msra.mxu0 %v979
    %1078 = vmatprep.subr.mxu0 0.0
    %1079 = vmatpush1.msra.mxu0 0.0
    %1080 = vmatprep.subr.mxu0 0.0
    %1081 = vmatpush1.msra.mxu0 0.0
    %1082 = vmatprep.subr.mxu0 0.0
    %1083 = vmatpush1.msra.mxu0 0.0
    %1084 = vmatprep.subr.mxu0 0.0
    %1085 = vmatpush1.msra.mxu0 0.0
    %1086 = vmatprep.subr.mxu0 0.0
    %1087 = vmatpush1.msra.mxu0 0.0
    %1088 = vmatprep.subr.mxu0 0.0
    %1089 = vmatpush1.msra.mxu0 0.0
    %1090 = vmatprep.subr.mxu0 0.0
    %1091 = vmatpush1.msra.mxu0 0.0
    %1092 = vmatprep.subr.mxu0 0.0
    %1093 = vmatpush1.msra.mxu0 0.0
    %1094 = vmatprep.subr.mxu0 0.0
    %1095 = vmatpush1.msra.mxu0 0.0
    %1096 = vmatprep.subr.mxu0 0.0
    %1097 = vmatpush1.msra.mxu0 0.0
    %1098 = vmatprep.subr.mxu0 0.0
    %1099 = vmatpush1.msra.mxu0 0.0
    %1100 = vmatprep.subr.mxu0 0.0
    %1101 = vmatpush1.msra.mxu0 0.0
    %1102 = vmatprep.subr.mxu0 0.0
    %1103 = vmatpush1.msra.mxu0 0.0
    %1104 = vmatprep.subr.mxu0 0.0
    %1105 = vmatpush1.msra.mxu0 0.0
    %1106 = vmatprep.subr.mxu0 0.0
    %1107 = vmatpush1.msra.mxu0 0.0
    %1108 = vmatprep.subr.mxu0 0.0
    %1109 = vmatpush1.msra.mxu0 0.0
    %1110 = vmatprep.subr.mxu0 0.0
    %1111 = vmatpush1.msra.mxu0 0.0
    %1112 = vmatprep.subr.mxu0 0.0
    %1113 = vmatpush1.msra.mxu0 0.0
    %1114 = vmatprep.subr.mxu0 0.0
    %1115 = vmatpush1.msra.mxu0 0.0
    %1116 = vmatprep.subr.mxu0 0.0
    %1117 = vmatpush1.msra.mxu0 0.0
    %1118 = vmatprep.subr.mxu0 0.0
    %1119 = vmatpush1.msra.mxu0 0.0
    %1120 = vmatprep.subr.mxu0 0.0
    %1121 = vmatpush1.msra.mxu0 0.0
    %1122 = vmatprep.subr.mxu0 0.0
    %1123 = vmatpush1.msra.mxu0 0.0
    %1124 = vmatprep.subr.mxu0 0.0
    %1125 = vmatpush1.msra.mxu0 0.0
    %1126 = vmatprep.subr.mxu0 0.0
    %1127 = vmatpush1.msra.mxu0 0.0
    %1128 = vmatprep.subr.mxu0 0.0
    %1129 = vmatpush1.msra.mxu0 0.0
    %1130 = vmatprep.subr.mxu0 0.0
    %1131 = vmatpush1.msra.mxu0 0.0
    %1132 = vmatprep.subr.mxu0 0.0
    %1133 = vmatpush1.msra.mxu0 0.0
    %1134 = vmatprep.mubr.f32.mxu0 0.0
    %1135 = vmatmul.mubr.f32.gmra.mrb[0].mxu0 %v1068
    %v1136 = vpop.f32.mrb[0].mxu0
    %v1137 = vadd.f32 %v1066, %v1136
    %v1138 = vpop.f32.mrb[0].mxu0
    %1139 = vdwg.mxu0
    %vm1140 = vcmask 123904
    %1141 = vst.msk [vmem:[#allocation2] sm:$0x3] %vm1140, %v1137
    // Predicated region
    $region10: #{tpu_custom_call.1} parent=1 // pred_check
      _
    $region11: #{tpu_custom_call.1} parent=1 // pred_check_branch
      %1143 = sbr.rel (0) target = $region13
    $region12: #{tpu_custom_call.1} parent=1 // pred_region
      %s1145 = ssub.s32 32, 32
      %1146 = vsyncadd [#allocation3], %s1145
      %s1148 = sshll.u32 [#allocation2], 4
      %s1149 = int_to_ptr.vmem [resolvable:$true] %s1148
      %1151 = dma.vmem_to_hbm [thread:$0]  %s1149, 32, %s2, [#allocation3]
    $region13: #{tpu_custom_call.1} parent=1 // pred_fallthru
      _
    // Predicated region
    $region14: #{tpu_custom_call.1} parent=1 // pred_check
      _
    $region15: #{tpu_custom_call.1} parent=1 // pred_check_branch
      %1153 = sbr.rel (0) target = $region17
    $region16: #{tpu_custom_call.1} parent=1 // pred_region
      %1154 = dma.done [#allocation3], 32
    $region17: #{tpu_custom_call.1} parent=1 // pred_fallthru
      _
    %1155 = vsyncpa [#allocation3], 1

</llo_original>
